<compile_context>
chip_gen: v7x
topology: tpu7x:2x2x1
jax: 0.10.0
libtpu: 0.0.40
codegen_flags: <defaults>
</compile_context>

<pallas_src>
import math
import numpy as np
import jax
import jax.numpy as jnp
from jax.experimental import pallas as pl
from jax.experimental.pallas import tpu as pltpu

# ---------------- small configuration consistent with the module ----------------
NB_FLOW   = 2          # nb_flow
D         = 4          # nb_in
E         = 8          # embedding_s
B         = 8          # batch
HID_EMB   = [32, 32]   # hidden_embedding
HID_DER   = [32, 32]   # hidden_derivative
NB_STEPS  = 16         # nb_steps (CC solver)
T1        = NB_STEPS + 1
DTYPE     = jnp.float32

H0     = HID_DER[0]
DH0    = D * H0                    # 128: lane width of the per-dim stacked integrand
SLAB_W = DH0 + HID_EMB[0]          # 160: widest packed operand (fused x-path weight)

_HI = jax.lax.Precision.HIGHEST    # reference path only


# ---------------- Clenshaw-Curtis weights (exact port of NeuralIntegral) --------
def compute_cc_weights(nb_steps):
    lam = np.arange(0, nb_steps + 1, 1).reshape(-1, 1)
    lam = np.cos((lam @ lam.T) * math.pi / nb_steps)
    lam[:, 0] = .5
    lam[:, -1] = .5 * lam[:, -1]
    lam = lam * 2 / nb_steps
    W = np.arange(0, nb_steps + 1, 1).reshape(-1, 1)
    W[np.arange(1, nb_steps + 1, 2)] = 0
    W = 2 / (1 - W ** 2)
    W[0] = 1
    W[np.arange(1, nb_steps + 1, 2)] = 0
    cc_weights = (lam.T @ W).astype(np.float32)                                  # (T1, 1)
    steps = np.cos(np.arange(0, nb_steps + 1, 1).reshape(-1, 1)
                   * math.pi / nb_steps).astype(np.float32)                      # (T1, 1)
    return cc_weights, steps


# ---------------- MADE autoregressive masks (natural ordering, seed 0) ----------
def made_masks(nin, hidden_sizes, seed=0):
    rng = np.random.RandomState(seed)
    L = len(hidden_sizes)
    m = {-1: np.arange(nin)}
    for l in range(L):
        m[l] = rng.randint(m[l - 1].min(), nin - 1, size=hidden_sizes[l])
    masks = [(m[l - 1][:, None] <= m[l][None, :]) for l in range(L)]
    masks.append((m[L - 1][:, None] < m[-1][None, :]))                           # (H_last, D)
    return masks


# ---------------- deterministic synthetic parameters for one UMNNMAF block ------
def init_flow_params(key):
    hs = [D] + HID_EMB + [E * D]
    masks = made_masks(D, HID_EMB)
    masks[-1] = np.concatenate([masks[-1]] * E, axis=1)     # output layout h[:, e*D + d]
    made_W, made_b = [], []
    for i, (h0, h1) in enumerate(zip(hs[:-1], hs[1:])):
        key, k1, k2 = jax.random.split(key, 3)
        W = jax.random.normal(k1, (h0, h1), DTYPE) / np.sqrt(h0)
        b = 0.1 * jax.random.normal(k2, (h1,), DTYPE)
        made_W.append(W * jnp.asarray(masks[i], DTYPE))
        made_b.append(b)
    gs = [1 + E] + HID_DER + [1]
    int_W, int_b = [], []
    for h0, h1 in zip(gs[:-1], gs[1:]):
        key, k1, k2 = jax.random.split(key, 3)
        int_W.append(jax.random.normal(k1, (h0, h1), DTYPE) / np.sqrt(h0))
        int_b.append(0.1 * jax.random.normal(k2, (h1,), DTYPE))
    scaling = jnp.zeros((D,), DTYPE)      # UMNNMAF.scaling (non-trainable zeros)
    return dict(made_W=made_W, made_b=made_b, int_W=int_W, int_b=int_b, scaling=scaling)


# ---------------- host-side packing: fold everything into ONE f32 slab -----------
def pack_flow(flow_params, cc_weights, steps):
    """Fold + coalesce all flow parameters / CC constants into one slab (one DMA).

    Exact host-side folds (no nonlinearity crossed):
      * first MADE layer (x-path) fused with the per-dim t-row of integrand layer 0
      * last MADE layer folded through the h-rows of integrand layer 0 (w_fold),
        fused with the z0 head; exp(scaling) folded into the z0 columns
      * inter-block feature-flip permutation folded into the next block's x-weights
      * shared integrand layers expanded to lane-stacked block-diagonal weights
      * CC abscissa / weights stored as (T1*B, 1) lane-broadcastable columns
    Every operand starts at an 8-aligned row (sublane-tile aligned slices in-kernel).
    """
    rows = []
    cursor = 0

    def put(mat):
        nonlocal cursor
        mat = np.asarray(mat, np.float32)
        if mat.ndim == 1:
            mat = mat.reshape(1, -1)
        nr, nc = mat.shape
        nr_pad = -(-nr // 8) * 8
        buf = np.zeros((nr_pad, SLAB_W), np.float32)
        buf[:nr, :nc] = mat
        rows.append(buf)
        off = cursor
        cursor += nr_pad
        return (off, nr, nc)

    eye_d = np.eye(D, dtype=np.float32)
    layout_blocks = []
    for blk, p in enumerate(flow_params):
        made_W = [np.asarray(w, np.float32) for w in p['made_W']]
        made_b = [np.asarray(b, np.float32) for b in p['made_b']]
        int_W = [np.asarray(w, np.float32) for w in p['int_W']]
        int_b = [np.asarray(b, np.float32) for b in p['int_b']]
        esc = np.exp(np.asarray(p['scaling'], np.float32))              # (D,)

        w_last, b_last = made_W[-1], made_b[-1]                         # (H, E*D), (E*D,)
        v0 = int_W[0]
        v0t, v0h, b0 = v0[0], v0[1:], int_b[0]                          # (H0,), (E,H0), (H0,)

        # fused x-path weight: [ per-dim t-row of integrand layer 0 | MADE layer 0 ]
        wx = np.concatenate([np.kron(eye_d, v0t.reshape(1, -1)), made_W[0]], axis=1)
        bx = np.concatenate([np.zeros(DH0, np.float32), made_b[0]])
        if blk > 0:
            wx = wx[::-1, :]     # fold the inter-block feature flip (input-row permute)

        ent = {'wx': put(wx), 'bx': put(bx)}

        ent['made_mid'] = [(put(w), put(b))
                           for w, b in zip(made_W[1:-1], made_b[1:-1])]

        # fused h-path weight: [ w_fold (H,128) | z0 head * exp(scaling) (H,D) ]
        w_last_r = w_last.reshape(-1, E, D)
        b_last_r = b_last.reshape(E, D)
        w_fold = np.concatenate([w_last_r[:, :, d] @ v0h for d in range(D)], axis=1)
        b_fold = np.concatenate([b_last_r[:, d] @ v0h + b0 for d in range(D)])
        wh = np.concatenate([w_fold, w_last[:, :D] * esc[None, :]], axis=1)     # (H, 132)
        bh = np.concatenate([b_fold, b_last[:D] * esc])                         # (132,)
        ent['wh'] = put(wh)
        ent['bh'] = put(bh)

        ent['int_mid'] = [(put(np.kron(eye_d, w)), put(np.tile(b, D)))
                          for w, b in zip(int_W[1:-1], int_b[1:-1])]

        ent['wl'] = put(np.kron(eye_d, int_W[-1]))                              # (128, D)
        ent['bl'] = put(np.tile(int_b[-1], D))
        ent['esc'] = put(esc)
        layout_blocks.append(ent)

    # flow-level Clenshaw-Curtis constants as lane-broadcastable columns
    c_abs = (np.asarray(steps, np.float32).reshape(-1) + 1.0) * 0.5             # (T1,)
    w_cc = 0.5 * np.asarray(cc_weights, np.float32).reshape(-1)                 # (T1,)
    layout_flow = {'ccol': put(np.repeat(c_abs, B).reshape(-1, 1)),             # (T1*B, 1)
                   'wcol': put(np.repeat(w_cc, B).reshape(-1, 1))}              # (T1*B, 1)

    slab = np.concatenate(rows, axis=0)                                         # (R, 160)
    return jnp.asarray(slab), layout_blocks, layout_flow


# ---------------- fused Pallas kernel: whole flow in one invocation --------------
def make_flow_kernel(layout_blocks, layout_flow, nb_flow):
    def mm(a, b):
        # default TPU matmul precision (single-pass bf16 MXU, f32 accumulation)
        return jnp.dot(a, b, preferred_element_type=jnp.float32)

    def elu(v):
        return jnp.where(v > 0, v, jnp.exp(v) - 1.0)

    def flip_lanes(v):
        # reverse the D feature lanes of a (B, D) value with VPU selects/adds only
        # (exact f32, off the MXU dependency chain)
        lane = jax.lax.broadcasted_iota(jnp.int32, v.shape, 1)
        out = jnp.zeros_like(v)
        for k in range(D):
            out = out + jnp.where(lane == (D - 1 - k), v[:, k:k + 1], 0.0)
        return out

    def kernel(x_ref, slab_ref, out_ref):
        def ld(ent):
            off, nr, nc = ent
            return slab_ref[off:off + nr, 0:nc]

        ccol = ld(layout_flow['ccol'])         # (T1*B, 1) quadrature abscissa (t+1)/2
        wcol = ld(layout_flow['wcol'])         # (T1*B, 1) 0.5 * cc_weights
        x = x_ref[...]                         # (B, D)

        for i in range(nb_flow):
            ent = layout_blocks[i]
            # x for the final elementwise product: flipped for blocks > 0 (the flip of
            # all matmul inputs is folded into wx on the host); exp(scaling) applied
            # here since it cannot be folded through the integrand's ELU(.)+1 output.
            xp = x if i == 0 else flip_lanes(x)
            x_prod = xp * ld(ent['esc'])                                   # (B, D)

            # fused x-path: integrand t-channel (per-dim lanes) + first MADE layer
            r = mm(x, ld(ent['wx'])) + ld(ent['bx'])                       # (B, 160)
            tv = r[:, :DH0]                                                # (B, 128)
            h = jnp.maximum(r[:, DH0:], 0.0)                               # (B, 32)
            for went, bent in ent['made_mid']:
                h = jnp.maximum(mm(h, ld(went)) + ld(bent), 0.0)

            # fused h-path: folded first integrand layer (per-dim lanes) + z0 head
            r2 = mm(h, ld(ent['wh'])) + ld(ent['bh'])                      # (B, 132)
            base = r2[:, :DH0]                                             # (B, 128)
            z0 = r2[:, DH0:]                                               # (B, D), esc folded

            # all T1 quadrature steps at once: implicit sublane replication +
            # lane-broadcast abscissa column (no replicated crep operand)
            base_t = jnp.broadcast_to(base[None], (T1, B, DH0)).reshape(T1 * B, DH0)
            tv_t = jnp.broadcast_to(tv[None], (T1, B, DH0)).reshape(T1 * B, DH0)
            a = elu(base_t + ccol * tv_t)                                  # (T1*B, 128)

            # shared integrand hidden layers as block-diagonal lane-dense matmuls
            for went, bent in ent['int_mid']:
                a = elu(mm(a, ld(went)) + ld(bent))
            y = elu(mm(a, ld(ent['wl'])) + ld(ent['bl'])) + 1.0            # (T1*B, D)

            # CC reduction without the dense `red` matrix: weight rows by 0.5*cc_w[s]
            # and sum the T1 sublane groups (VPU adds, off the MXU chain)
            zq = (y * wcol).reshape(T1, B, D).sum(axis=0)                  # (B, D)

            x = zq * x_prod + z0

        # the flip after the last block and the flow's final flip cancel exactly
        out_ref[...] = x

    return kernel


def build_forward(layout_blocks, layout_flow):
    kernel = make_flow_kernel(layout_blocks, layout_flow, len(layout_blocks))
    vmem = pl.BlockSpec(memory_space=pltpu.MemorySpace.VMEM)
    call = pl.pallas_call(
        kernel,
        out_shape=jax.ShapeDtypeStruct((B, D), DTYPE),
        in_specs=[vmem, vmem],
        out_specs=vmem,
    )
    return jax.jit(call)


# ---------------- pure-JAX reference (mirrors the PyTorch code path) --------------
def _umnnmaf_ref(x, p, cc_weights, steps):
    mm = lambda a, b: jnp.dot(a, b, precision=_HI)
    elu = lambda v: jnp.where(v > 0, v, jnp.exp(v) - 1.0)
    Bx = x.shape[0]
    h = x
    nW = len(p['made_W'])
    for i in range(nW):
        h = mm(h, p['made_W'][i]) + p['made_b'][i]
        if i < nW - 1:
            h = jnp.maximum(h, 0.0)
    z0 = h[:, :D]                                           # h.view(B,E,D)[:,0,:]
    c = (jnp.asarray(steps.reshape(-1)) + 1.0) * 0.5        # (T1,)
    X = x[:, None, :] * c[None, :, None]                    # (B, T1, D)
    h_r = jnp.transpose(h.reshape(Bx, E, D), (0, 2, 1))     # (B, D, E)
    hh = jnp.broadcast_to(h_r[:, None, :, :], (Bx, T1, D, E))
    feats = jnp.concatenate([X[..., None], hh], axis=-1).reshape(-1, 1 + E)
    a = feats
    nV = len(p['int_W'])
    for i in range(nV):
        a = mm(a, p['int_W'][i]) + p['int_b'][i]
        a = elu(a) + (1.0 if i == nV - 1 else 0.0)
    y = a.reshape(Bx, T1, D)
    ccw = jnp.asarray(cc_weights.reshape(-1))
    zint = jnp.sum(ccw[None, :, None] * y, axis=1) * x * 0.5
    return jnp.exp(p['scaling'])[None, :] * (zint + z0)


def umnnmaf_flow_ref(x, flow_params, cc_weights, steps):
    for p in flow_params:
        x = _umnnmaf_ref(x, p, cc_weights, steps)[:, ::-1]
    return x[:, ::-1]


# TODO(synk): only the forward pass is implemented; invert / compute_ll /
#             compute_log_jac / compute_bpp / compute_lipschitz are out of scope.

if __name__ == "__main__":
    key = jax.random.PRNGKey(0)
    key, kx = jax.random.split(key)
    x = jax.random.normal(kx, (B, D), DTYPE)

    flow_params = []
    for _ in range(NB_FLOW):
        key, kf = jax.random.split(key)
        flow_params.append(init_flow_params(kf))

    cc_weights, steps = compute_cc_weights(NB_STEPS)

    # one-time host packing (weight folding, flip fold, CC constants) into one slab
    slab, layout_blocks, layout_flow = pack_flow(flow_params, cc_weights, steps)
    forward = build_forward(layout_blocks, layout_flow)

    out = jax.block_until_ready(forward(x, slab))
    ref = jax.block_until_ready(umnnmaf_flow_ref(x, flow_params, cc_weights, steps))

    assert out.shape == (B, D)
    out_np, ref_np = np.asarray(out), np.asarray(ref)
    # Tolerance reflects the kernel's default single-pass bf16 MXU matmuls
    # (~2^-9 relative per operand, ~10 chained matmuls across 2 flow blocks)
    # compared against an f32 Precision.HIGHEST reference.
    if not np.allclose(out_np, ref_np, atol=5e-2, rtol=5e-2):
        raise AssertionError(
            "Pallas kernel output does not match reference "
            f"(max abs diff = {np.max(np.abs(out_np - ref_np)):.4e})")
    print("KERNEL_OK")
</pallas_src>

<mosaic_0001>
module attributes {stable_mosaic.version = 11 : i64} {
  func.func @kernel(%arg0: memref<8x4xf32, #tpu.memory_space<vmem>>, %arg1: memref<1024x160xf32, #tpu.memory_space<vmem>>, %arg2: memref<8x4xf32, #tpu.memory_space<vmem>>) attributes {dimension_semantics = [], scalar_prefetch = 0 : i64, scratch_operands = 0 : i64, tpu.core_type = #tpu.core_type<tc>} {
    %c752 = arith.constant 752 : index
    %c0 = arith.constant 0 : index
    %0 = vector.load %arg1[%c752, %c0] : memref<1024x160xf32, #tpu.memory_space<vmem>>, vector<136x1xf32>
    %c888 = arith.constant 888 : index
    %c0_0 = arith.constant 0 : index
    %1 = vector.load %arg1[%c888, %c0_0] : memref<1024x160xf32, #tpu.memory_space<vmem>>, vector<136x1xf32>
    %c0_1 = arith.constant 0 : index
    %c0_2 = arith.constant 0 : index
    %2 = vector.load %arg0[%c0_1, %c0_2] : memref<8x4xf32, #tpu.memory_space<vmem>>, vector<8x4xf32>
    %c368 = arith.constant 368 : index
    %c0_3 = arith.constant 0 : index
    %3 = vector.load %arg1[%c368, %c0_3] : memref<1024x160xf32, #tpu.memory_space<vmem>>, vector<1x4xf32>
    %4 = vector.broadcast %3 : vector<1x4xf32> to vector<8x4xf32>
    %5 = arith.mulf %2, %4 : vector<8x4xf32>
    %c0_4 = arith.constant 0 : index
    %c0_5 = arith.constant 0 : index
    %6 = vector.load %arg1[%c0_4, %c0_5] : memref<1024x160xf32, #tpu.memory_space<vmem>>, vector<4x160xf32>
    %cst = arith.constant dense<0.000000e+00> : vector<8x160xf32>
    %7 = tpu.matmul %2, %6, %cst {dimension_numbers = #tpu.dot_dimension_numbers<[1], [0], [0], [1], [0, 0, 1, 1], [], []>} : vector<8x4xf32>, vector<4x160xf32>, vector<8x160xf32> -> vector<8x160xf32>
    %c8 = arith.constant 8 : index
    %c0_6 = arith.constant 0 : index
    %8 = vector.load %arg1[%c8, %c0_6] : memref<1024x160xf32, #tpu.memory_space<vmem>>, vector<1x160xf32>
    %9 = vector.broadcast %8 : vector<1x160xf32> to vector<8x160xf32>
    %10 = arith.addf %7, %9 : vector<8x160xf32>
    %11 = vector.extract_strided_slice %10 {offsets = [0, 0], sizes = [8, 128], strides = [1, 1]} : vector<8x160xf32> to vector<8x128xf32>
    %12 = vector.extract_strided_slice %10 {offsets = [0, 128], sizes = [8, 32], strides = [1, 1]} : vector<8x160xf32> to vector<8x32xf32>
    %cst_7 = arith.constant 0.000000e+00 : f32
    %13 = vector.broadcast %cst_7 : f32 to vector<8x32xf32>
    %14 = arith.maximumf %12, %13 : vector<8x32xf32>
    %c16 = arith.constant 16 : index
    %c0_8 = arith.constant 0 : index
    %15 = vector.load %arg1[%c16, %c0_8] : memref<1024x160xf32, #tpu.memory_space<vmem>>, vector<32x32xf32>
    %cst_9 = arith.constant dense<0.000000e+00> : vector<8x32xf32>
    %16 = tpu.matmul %14, %15, %cst_9 {dimension_numbers = #tpu.dot_dimension_numbers<[1], [0], [0], [1], [0, 0, 1, 1], [], []>} : vector<8x32xf32>, vector<32x32xf32>, vector<8x32xf32> -> vector<8x32xf32>
    %c48 = arith.constant 48 : index
    %c0_10 = arith.constant 0 : index
    %17 = vector.load %arg1[%c48, %c0_10] : memref<1024x160xf32, #tpu.memory_space<vmem>>, vector<1x32xf32>
    %18 = vector.broadcast %17 : vector<1x32xf32> to vector<8x32xf32>
    %19 = arith.addf %16, %18 : vector<8x32xf32>
    %cst_11 = arith.constant 0.000000e+00 : f32
    %20 = vector.broadcast %cst_11 : f32 to vector<8x32xf32>
    %21 = arith.maximumf %19, %20 : vector<8x32xf32>
    %c56 = arith.constant 56 : index
    %c0_12 = arith.constant 0 : index
    %22 = vector.load %arg1[%c56, %c0_12] : memref<1024x160xf32, #tpu.memory_space<vmem>>, vector<32x132xf32>
    %cst_13 = arith.constant dense<0.000000e+00> : vector<8x132xf32>
    %23 = tpu.matmul %21, %22, %cst_13 {dimension_numbers = #tpu.dot_dimension_numbers<[1], [0], [0], [1], [0, 0, 1, 1], [], []>} : vector<8x32xf32>, vector<32x132xf32>, vector<8x132xf32> -> vector<8x132xf32>
    %c88 = arith.constant 88 : index
    %c0_14 = arith.constant 0 : index
    %24 = vector.load %arg1[%c88, %c0_14] : memref<1024x160xf32, #tpu.memory_space<vmem>>, vector<1x132xf32>
    %25 = vector.broadcast %24 : vector<1x132xf32> to vector<8x132xf32>
    %26 = arith.addf %23, %25 : vector<8x132xf32>
    %27 = vector.extract_strided_slice %26 {offsets = [0, 0], sizes = [8, 128], strides = [1, 1]} : vector<8x132xf32> to vector<8x128xf32>
    %28 = vector.extract_strided_slice %26 {offsets = [0, 128], sizes = [8, 4], strides = [1, 1]} : vector<8x132xf32> to vector<8x4xf32>
    %29 = vector.shape_cast %27 : vector<8x128xf32> to vector<1x8x128xf32>
    %30 = vector.shape_cast %29 : vector<1x8x128xf32> to vector<1x8x128xf32>
    %31 = vector.broadcast %30 : vector<1x8x128xf32> to vector<17x8x128xf32>
    %32 = vector.shape_cast %31 : vector<17x8x128xf32> to vector<136x128xf32>
    %33 = vector.shape_cast %11 : vector<8x128xf32> to vector<1x8x128xf32>
    %34 = vector.shape_cast %33 : vector<1x8x128xf32> to vector<1x8x128xf32>
    %35 = vector.broadcast %34 : vector<1x8x128xf32> to vector<17x8x128xf32>
    %36 = vector.shape_cast %35 : vector<17x8x128xf32> to vector<136x128xf32>
    %37 = vector.broadcast %0 : vector<136x1xf32> to vector<136x128xf32>
    %38 = arith.mulf %37, %36 : vector<136x128xf32>
    %39 = arith.addf %32, %38 : vector<136x128xf32>
    %cst_15 = arith.constant 0.000000e+00 : f32
    %40 = vector.broadcast %cst_15 : f32 to vector<136x128xf32>
    %41 = arith.cmpf ogt, %39, %40 : vector<136x128xf32>
    %42 = math.exp %39 : vector<136x128xf32>
    %cst_16 = arith.constant 1.000000e+00 : f32
    %43 = vector.broadcast %cst_16 : f32 to vector<136x128xf32>
    %44 = arith.subf %42, %43 : vector<136x128xf32>
    %45 = arith.select %41, %39, %44 : vector<136x128xi1>, vector<136x128xf32>
    %c96 = arith.constant 96 : index
    %c0_17 = arith.constant 0 : index
    %46 = vector.load %arg1[%c96, %c0_17] : memref<1024x160xf32, #tpu.memory_space<vmem>>, vector<128x128xf32>
    %cst_18 = arith.constant dense<0.000000e+00> : vector<136x128xf32>
    %47 = tpu.matmul %45, %46, %cst_18 {dimension_numbers = #tpu.dot_dimension_numbers<[1], [0], [0], [1], [0, 0, 1, 1], [], []>} : vector<136x128xf32>, vector<128x128xf32>, vector<136x128xf32> -> vector<136x128xf32>
    %c224 = arith.constant 224 : index
    %c0_19 = arith.constant 0 : index
    %48 = vector.load %arg1[%c224, %c0_19] : memref<1024x160xf32, #tpu.memory_space<vmem>>, vector<1x128xf32>
    %49 = vector.broadcast %48 : vector<1x128xf32> to vector<136x128xf32>
    %50 = arith.addf %47, %49 : vector<136x128xf32>
    %cst_20 = arith.constant 0.000000e+00 : f32
    %51 = vector.broadcast %cst_20 : f32 to vector<136x128xf32>
    %52 = arith.cmpf ogt, %50, %51 : vector<136x128xf32>
    %53 = math.exp %50 : vector<136x128xf32>
    %cst_21 = arith.constant 1.000000e+00 : f32
    %54 = vector.broadcast %cst_21 : f32 to vector<136x128xf32>
    %55 = arith.subf %53, %54 : vector<136x128xf32>
    %56 = arith.select %52, %50, %55 : vector<136x128xi1>, vector<136x128xf32>
    %c232 = arith.constant 232 : index
    %c0_22 = arith.constant 0 : index
    %57 = vector.load %arg1[%c232, %c0_22] : memref<1024x160xf32, #tpu.memory_space<vmem>>, vector<128x4xf32>
    %cst_23 = arith.constant dense<0.000000e+00> : vector<136x4xf32>
    %58 = tpu.matmul %56, %57, %cst_23 {dimension_numbers = #tpu.dot_dimension_numbers<[1], [0], [0], [1], [0, 0, 1, 1], [], []>} : vector<136x128xf32>, vector<128x4xf32>, vector<136x4xf32> -> vector<136x4xf32>
    %c360 = arith.constant 360 : index
    %c0_24 = arith.constant 0 : index
    %59 = vector.load %arg1[%c360, %c0_24] : memref<1024x160xf32, #tpu.memory_space<vmem>>, vector<1x4xf32>
    %60 = vector.broadcast %59 : vector<1x4xf32> to vector<136x4xf32>
    %61 = arith.addf %58, %60 : vector<136x4xf32>
    %cst_25 = arith.constant 0.000000e+00 : f32
    %62 = vector.broadcast %cst_25 : f32 to vector<136x4xf32>
    %63 = arith.cmpf ogt, %61, %62 : vector<136x4xf32>
    %64 = math.exp %61 : vector<136x4xf32>
    %cst_26 = arith.constant 1.000000e+00 : f32
    %65 = vector.broadcast %cst_26 : f32 to vector<136x4xf32>
    %66 = arith.subf %64, %65 : vector<136x4xf32>
    %67 = arith.select %63, %61, %66 : vector<136x4xi1>, vector<136x4xf32>
    %cst_27 = arith.constant 1.000000e+00 : f32
    %68 = vector.broadcast %cst_27 : f32 to vector<136x4xf32>
    %69 = arith.addf %67, %68 : vector<136x4xf32>
    %70 = vector.broadcast %1 : vector<136x1xf32> to vector<136x4xf32>
    %71 = arith.mulf %69, %70 : vector<136x4xf32>
    %72 = vector.shape_cast %71 : vector<136x4xf32> to vector<17x8x4xf32>
    %cst_28 = arith.constant dense<0.000000e+00> : vector<8x4xf32>
    %73 = vector.multi_reduction <add>, %72, %cst_28 [0] : vector<17x8x4xf32> to vector<8x4xf32>
    %74 = arith.mulf %73, %5 : vector<8x4xf32>
    %75 = arith.addf %74, %28 : vector<8x4xf32>
    %76 = tpu.iota {dimensions = array<i32: 1>} : vector<8x4xi32>
    %cst_29 = arith.constant 0.000000e+00 : f32
    %77 = vector.broadcast %cst_29 : f32 to vector<8x4xf32>
    %c3_i32 = arith.constant 3 : i32
    %78 = vector.broadcast %c3_i32 : i32 to vector<8x4xi32>
    %79 = arith.cmpi eq, %76, %78 : vector<8x4xi32>
    %80 = vector.extract_strided_slice %75 {offsets = [0, 0], sizes = [8, 1], strides = [1, 1]} : vector<8x4xf32> to vector<8x1xf32>
    %cst_30 = arith.constant 0.000000e+00 : f32
    %81 = vector.shape_cast %80 : vector<8x1xf32> to vector<8x1xf32>
    %82 = vector.broadcast %81 : vector<8x1xf32> to vector<8x4xf32>
    %83 = vector.broadcast %cst_30 : f32 to vector<8x4xf32>
    %84 = arith.select %79, %82, %83 : vector<8x4xi1>, vector<8x4xf32>
    %85 = arith.addf %77, %84 : vector<8x4xf32>
    %c2_i32 = arith.constant 2 : i32
    %86 = vector.broadcast %c2_i32 : i32 to vector<8x4xi32>
    %87 = arith.cmpi eq, %76, %86 : vector<8x4xi32>
    %88 = vector.extract_strided_slice %75 {offsets = [0, 1], sizes = [8, 1], strides = [1, 1]} : vector<8x4xf32> to vector<8x1xf32>
    %cst_31 = arith.constant 0.000000e+00 : f32
    %89 = vector.shape_cast %88 : vector<8x1xf32> to vector<8x1xf32>
    %90 = vector.broadcast %89 : vector<8x1xf32> to vector<8x4xf32>
    %91 = vector.broadcast %cst_31 : f32 to vector<8x4xf32>
    %92 = arith.select %87, %90, %91 : vector<8x4xi1>, vector<8x4xf32>
    %93 = arith.addf %85, %92 : vector<8x4xf32>
    %c1_i32 = arith.constant 1 : i32
    %94 = vector.broadcast %c1_i32 : i32 to vector<8x4xi32>
    %95 = arith.cmpi eq, %76, %94 : vector<8x4xi32>
    %96 = vector.extract_strided_slice %75 {offsets = [0, 2], sizes = [8, 1], strides = [1, 1]} : vector<8x4xf32> to vector<8x1xf32>
    %cst_32 = arith.constant 0.000000e+00 : f32
    %97 = vector.shape_cast %96 : vector<8x1xf32> to vector<8x1xf32>
    %98 = vector.broadcast %97 : vector<8x1xf32> to vector<8x4xf32>
    %99 = vector.broadcast %cst_32 : f32 to vector<8x4xf32>
    %100 = arith.select %95, %98, %99 : vector<8x4xi1>, vector<8x4xf32>
    %101 = arith.addf %93, %100 : vector<8x4xf32>
    %c0_i32 = arith.constant 0 : i32
    %102 = vector.broadcast %c0_i32 : i32 to vector<8x4xi32>
    %103 = arith.cmpi eq, %76, %102 : vector<8x4xi32>
    %104 = vector.extract_strided_slice %75 {offsets = [0, 3], sizes = [8, 1], strides = [1, 1]} : vector<8x4xf32> to vector<8x1xf32>
    %cst_33 = arith.constant 0.000000e+00 : f32
    %105 = vector.shape_cast %104 : vector<8x1xf32> to vector<8x1xf32>
    %106 = vector.broadcast %105 : vector<8x1xf32> to vector<8x4xf32>
    %107 = vector.broadcast %cst_33 : f32 to vector<8x4xf32>
    %108 = arith.select %103, %106, %107 : vector<8x4xi1>, vector<8x4xf32>
    %109 = arith.addf %101, %108 : vector<8x4xf32>
    %c744 = arith.constant 744 : index
    %c0_34 = arith.constant 0 : index
    %110 = vector.load %arg1[%c744, %c0_34] : memref<1024x160xf32, #tpu.memory_space<vmem>>, vector<1x4xf32>
    %111 = vector.broadcast %110 : vector<1x4xf32> to vector<8x4xf32>
    %112 = arith.mulf %109, %111 : vector<8x4xf32>
    %c376 = arith.constant 376 : index
    %c0_35 = arith.constant 0 : index
    %113 = vector.load %arg1[%c376, %c0_35] : memref<1024x160xf32, #tpu.memory_space<vmem>>, vector<4x160xf32>
    %cst_36 = arith.constant dense<0.000000e+00> : vector<8x160xf32>
    %114 = tpu.matmul %75, %113, %cst_36 {dimension_numbers = #tpu.dot_dimension_numbers<[1], [0], [0], [1], [0, 0, 1, 1], [], []>} : vector<8x4xf32>, vector<4x160xf32>, vector<8x160xf32> -> vector<8x160xf32>
    %c384 = arith.constant 384 : index
    %c0_37 = arith.constant 0 : index
    %115 = vector.load %arg1[%c384, %c0_37] : memref<1024x160xf32, #tpu.memory_space<vmem>>, vector<1x160xf32>
    %116 = vector.broadcast %115 : vector<1x160xf32> to vector<8x160xf32>
    %117 = arith.addf %114, %116 : vector<8x160xf32>
    %118 = vector.extract_strided_slice %117 {offsets = [0, 0], sizes = [8, 128], strides = [1, 1]} : vector<8x160xf32> to vector<8x128xf32>
    %119 = vector.extract_strided_slice %117 {offsets = [0, 128], sizes = [8, 32], strides = [1, 1]} : vector<8x160xf32> to vector<8x32xf32>
    %cst_38 = arith.constant 0.000000e+00 : f32
    %120 = vector.broadcast %cst_38 : f32 to vector<8x32xf32>
    %121 = arith.maximumf %119, %120 : vector<8x32xf32>
    %c392 = arith.constant 392 : index
    %c0_39 = arith.constant 0 : index
    %122 = vector.load %arg1[%c392, %c0_39] : memref<1024x160xf32, #tpu.memory_space<vmem>>, vector<32x32xf32>
    %cst_40 = arith.constant dense<0.000000e+00> : vector<8x32xf32>
    %123 = tpu.matmul %121, %122, %cst_40 {dimension_numbers = #tpu.dot_dimension_numbers<[1], [0], [0], [1], [0, 0, 1, 1], [], []>} : vector<8x32xf32>, vector<32x32xf32>, vector<8x32xf32> -> vector<8x32xf32>
    %c424 = arith.constant 424 : index
    %c0_41 = arith.constant 0 : index
    %124 = vector.load %arg1[%c424, %c0_41] : memref<1024x160xf32, #tpu.memory_space<vmem>>, vector<1x32xf32>
    %125 = vector.broadcast %124 : vector<1x32xf32> to vector<8x32xf32>
    %126 = arith.addf %123, %125 : vector<8x32xf32>
    %cst_42 = arith.constant 0.000000e+00 : f32
    %127 = vector.broadcast %cst_42 : f32 to vector<8x32xf32>
    %128 = arith.maximumf %126, %127 : vector<8x32xf32>
    %c432 = arith.constant 432 : index
    %c0_43 = arith.constant 0 : index
    %129 = vector.load %arg1[%c432, %c0_43] : memref<1024x160xf32, #tpu.memory_space<vmem>>, vector<32x132xf32>
    %cst_44 = arith.constant dense<0.000000e+00> : vector<8x132xf32>
    %130 = tpu.matmul %128, %129, %cst_44 {dimension_numbers = #tpu.dot_dimension_numbers<[1], [0], [0], [1], [0, 0, 1, 1], [], []>} : vector<8x32xf32>, vector<32x132xf32>, vector<8x132xf32> -> vector<8x132xf32>
    %c464 = arith.constant 464 : index
    %c0_45 = arith.constant 0 : index
    %131 = vector.load %arg1[%c464, %c0_45] : memref<1024x160xf32, #tpu.memory_space<vmem>>, vector<1x132xf32>
    %132 = vector.broadcast %131 : vector<1x132xf32> to vector<8x132xf32>
    %133 = arith.addf %130, %132 : vector<8x132xf32>
    %134 = vector.extract_strided_slice %133 {offsets = [0, 0], sizes = [8, 128], strides = [1, 1]} : vector<8x132xf32> to vector<8x128xf32>
    %135 = vector.extract_strided_slice %133 {offsets = [0, 128], sizes = [8, 4], strides = [1, 1]} : vector<8x132xf32> to vector<8x4xf32>
    %136 = vector.shape_cast %134 : vector<8x128xf32> to vector<1x8x128xf32>
    %137 = vector.shape_cast %136 : vector<1x8x128xf32> to vector<1x8x128xf32>
    %138 = vector.broadcast %137 : vector<1x8x128xf32> to vector<17x8x128xf32>
    %139 = vector.shape_cast %138 : vector<17x8x128xf32> to vector<136x128xf32>
    %140 = vector.shape_cast %118 : vector<8x128xf32> to vector<1x8x128xf32>
    %141 = vector.shape_cast %140 : vector<1x8x128xf32> to vector<1x8x128xf32>
    %142 = vector.broadcast %141 : vector<1x8x128xf32> to vector<17x8x128xf32>
    %143 = vector.shape_cast %142 : vector<17x8x128xf32> to vector<136x128xf32>
    %144 = vector.broadcast %0 : vector<136x1xf32> to vector<136x128xf32>
    %145 = arith.mulf %144, %143 : vector<136x128xf32>
    %146 = arith.addf %139, %145 : vector<136x128xf32>
    %cst_46 = arith.constant 0.000000e+00 : f32
    %147 = vector.broadcast %cst_46 : f32 to vector<136x128xf32>
    %148 = arith.cmpf ogt, %146, %147 : vector<136x128xf32>
    %149 = math.exp %146 : vector<136x128xf32>
    %cst_47 = arith.constant 1.000000e+00 : f32
    %150 = vector.broadcast %cst_47 : f32 to vector<136x128xf32>
    %151 = arith.subf %149, %150 : vector<136x128xf32>
    %152 = arith.select %148, %146, %151 : vector<136x128xi1>, vector<136x128xf32>
    %c472 = arith.constant 472 : index
    %c0_48 = arith.constant 0 : index
    %153 = vector.load %arg1[%c472, %c0_48] : memref<1024x160xf32, #tpu.memory_space<vmem>>, vector<128x128xf32>
    %cst_49 = arith.constant dense<0.000000e+00> : vector<136x128xf32>
    %154 = tpu.matmul %152, %153, %cst_49 {dimension_numbers = #tpu.dot_dimension_numbers<[1], [0], [0], [1], [0, 0, 1, 1], [], []>} : vector<136x128xf32>, vector<128x128xf32>, vector<136x128xf32> -> vector<136x128xf32>
    %c600 = arith.constant 600 : index
    %c0_50 = arith.constant 0 : index
    %155 = vector.load %arg1[%c600, %c0_50] : memref<1024x160xf32, #tpu.memory_space<vmem>>, vector<1x128xf32>
    %156 = vector.broadcast %155 : vector<1x128xf32> to vector<136x128xf32>
    %157 = arith.addf %154, %156 : vector<136x128xf32>
    %cst_51 = arith.constant 0.000000e+00 : f32
    %158 = vector.broadcast %cst_51 : f32 to vector<136x128xf32>
    %159 = arith.cmpf ogt, %157, %158 : vector<136x128xf32>
    %160 = math.exp %157 : vector<136x128xf32>
    %cst_52 = arith.constant 1.000000e+00 : f32
    %161 = vector.broadcast %cst_52 : f32 to vector<136x128xf32>
    %162 = arith.subf %160, %161 : vector<136x128xf32>
    %163 = arith.select %159, %157, %162 : vector<136x128xi1>, vector<136x128xf32>
    %c608 = arith.constant 608 : index
    %c0_53 = arith.constant 0 : index
    %164 = vector.load %arg1[%c608, %c0_53] : memref<1024x160xf32, #tpu.memory_space<vmem>>, vector<128x4xf32>
    %cst_54 = arith.constant dense<0.000000e+00> : vector<136x4xf32>
    %165 = tpu.matmul %163, %164, %cst_54 {dimension_numbers = #tpu.dot_dimension_numbers<[1], [0], [0], [1], [0, 0, 1, 1], [], []>} : vector<136x128xf32>, vector<128x4xf32>, vector<136x4xf32> -> vector<136x4xf32>
    %c736 = arith.constant 736 : index
    %c0_55 = arith.constant 0 : index
    %166 = vector.load %arg1[%c736, %c0_55] : memref<1024x160xf32, #tpu.memory_space<vmem>>, vector<1x4xf32>
    %167 = vector.broadcast %166 : vector<1x4xf32> to vector<136x4xf32>
    %168 = arith.addf %165, %167 : vector<136x4xf32>
    %cst_56 = arith.constant 0.000000e+00 : f32
    %169 = vector.broadcast %cst_56 : f32 to vector<136x4xf32>
    %170 = arith.cmpf ogt, %168, %169 : vector<136x4xf32>
    %171 = math.exp %168 : vector<136x4xf32>
    %cst_57 = arith.constant 1.000000e+00 : f32
    %172 = vector.broadcast %cst_57 : f32 to vector<136x4xf32>
    %173 = arith.subf %171, %172 : vector<136x4xf32>
    %174 = arith.select %170, %168, %173 : vector<136x4xi1>, vector<136x4xf32>
    %cst_58 = arith.constant 1.000000e+00 : f32
    %175 = vector.broadcast %cst_58 : f32 to vector<136x4xf32>
    %176 = arith.addf %174, %175 : vector<136x4xf32>
    %177 = vector.broadcast %1 : vector<136x1xf32> to vector<136x4xf32>
    %178 = arith.mulf %176, %177 : vector<136x4xf32>
    %179 = vector.shape_cast %178 : vector<136x4xf32> to vector<17x8x4xf32>
    %cst_59 = arith.constant dense<0.000000e+00> : vector<8x4xf32>
    %180 = vector.multi_reduction <add>, %179, %cst_59 [0] : vector<17x8x4xf32> to vector<8x4xf32>
    %181 = arith.mulf %180, %112 : vector<8x4xf32>
    %182 = arith.addf %181, %135 : vector<8x4xf32>
    %c0_60 = arith.constant 0 : index
    %c0_61 = arith.constant 0 : index
    %183 = vector.load %arg2[%c0_60, %c0_61] : memref<8x4xf32, #tpu.memory_space<vmem>>, vector<8x4xf32>
    tpu.vector_store %arg2[%c0_60, %c0_61], %182 {strides = array<i32>} : memref<8x4xf32, #tpu.memory_space<vmem>>, vector<8x4xf32>,
    return
  }
}

</mosaic_0001>

<llo_original>
// kernel: tpu_custom_call.1
$region0: #{tpu_custom_call.1}
  #allocation0 [shape = 'u32[]', space=smem, size = 0x4, offset = 0x4, fixed_abs, tag = 'smem constant byte address 0x4 - core index']
  #allocation1 [shape = 'u32[144,128]{1,0:T(1,128)}', space=vmem, size = 0x12000, scoped, tag = 'internal scratch']
  %s0 = inlined_call_operand.vmem [shape: f32[8,4], index: 0, kind: input, shape index: {}]
  %s1 = inlined_call_operand.vmem [shape: f32[1024,160], index: 1, kind: input, shape index: {}]
  %s2 = inlined_call_operand.vmem [shape: f32[8,4], index: 2, kind: output, shape index: {}]
  %s3 = sld [smem:[#allocation0]]
  $region18: #{tpu_custom_call.1} parent=0
    _
  %s5 = ssub.s32 1, %s3
  %s6 = scalar_select 0, %s5, %s3
  // Predicated region
  $region2: #{tpu_custom_call.1} parent=0 // pred_check
    _
  $region3: #{tpu_custom_call.1} parent=0 // pred_check_branch
    %8 = sbr.rel (0) target = $region5
  $region4: #{tpu_custom_call.1} parent=0 // pred_region
    _
  $region5: #{tpu_custom_call.1} parent=0 // pred_fallthru
    _
  // Predicated region
  $region6: #{tpu_custom_call.1} parent=0 // pred_check
    _
  $region7: #{tpu_custom_call.1} parent=0 // pred_check_branch
    %10 = sbr.rel (0) target = $region9
  $region8: #{tpu_custom_call.1} parent=0 // pred_region
    _
  $region9: #{tpu_custom_call.1} parent=0 // pred_fallthru
    _
  %v11 = vld [vmem:[%s1 + $0x5e0] sm:$0xff]
  %v12 = vld [vmem:[%s1 + $0x5f0] sm:$0xff]
  %v13 = vld [vmem:[%s1 + $0x600] sm:$0xff]
  %v14 = vld [vmem:[%s1 + $0x610] sm:$0xff]
  %v15 = vld [vmem:[%s1 + $0x620] sm:$0xff]
  %v16 = vld [vmem:[%s1 + $0x630] sm:$0xff]
  %v17 = vld [vmem:[%s1 + $0x640] sm:$0xff]
  %v18 = vld [vmem:[%s1 + $0x650] sm:$0xff]
  %v19 = vld [vmem:[%s1 + $0x660] sm:$0xff]
  %v20 = vld [vmem:[%s1 + $0x670] sm:$0xff]
  %v21 = vld [vmem:[%s1 + $0x680] sm:$0xff]
  %v22 = vld [vmem:[%s1 + $0x690] sm:$0xff]
  %v23 = vld [vmem:[%s1 + $0x6a0] sm:$0xff]
  %v24 = vld [vmem:[%s1 + $0x6b0] sm:$0xff]
  %v25 = vld [vmem:[%s1 + $0x6c0] sm:$0xff]
  %v26 = vld [vmem:[%s1 + $0x6d0] sm:$0xff]
  %v27 = vld [vmem:[%s1 + $0x6e0] sm:$0xff]
  %v28 = vld [vmem:[%s1 + $0x6f0] sm:$0xff]
  %v29 = vld [vmem:[%s1 + $0x700] sm:$0xff]
  %v30 = vld [vmem:[%s1 + $0x710] sm:$0xff]
  %v31 = vld [vmem:[%s1 + $0x720] sm:$0xff]
  %v32 = vld [vmem:[%s1 + $0x730] sm:$0xff]
  %v33 = vld [vmem:[%s1 + $0x740] sm:$0xff]
  %v34 = vld [vmem:[%s1 + $0x750] sm:$0xff]
  %v35 = vld [vmem:[%s1 + $0x760] sm:$0xff]
  %v36 = vld [vmem:[%s1 + $0x770] sm:$0xff]
  %v37 = vld [vmem:[%s1 + $0x780] sm:$0xff]
  %v38 = vld [vmem:[%s1 + $0x790] sm:$0xff]
  %v39 = vld [vmem:[%s1 + $0x7a0] sm:$0xff]
  %v40 = vld [vmem:[%s1 + $0x7b0] sm:$0xff]
  %v41 = vld [vmem:[%s1 + $0x7c0] sm:$0xff]
  %v42 = vld [vmem:[%s1 + $0x7d0] sm:$0xff]
  %v43 = vld [vmem:[%s1 + $0x7e0] sm:$0xff]
  %v44 = vld [vmem:[%s1 + $0x7f0] sm:$0xff]
  %v45 = vld [vmem:[%s0] sm:$0xff]
  %v46 = vld [vmem:[%s1 + $0x2e0] ss:$0 sm:$0xff]
  %v47 = vmul.f32 %v45, %v46
  %v48 = vld [vmem:[%s1] sm:$0xf]
  %v49 = vld [vmem:[%s1 + $0x8] sm:$0xf]
  %s50 = scalar_lea.vmem %s1, 16
  %v51 = vld [vmem:[%s50] ss:$8 sm:$0x3]
  %v53 = vlaneseq
  %v54 = vshrl.u32 %v53, 7
  %v55 = vsub.s32 0, %v54
  %v56 = vrot.slane %v51, %v55
  %v57 = vlaneseq
  %v58 = vshrl.u32 %v57, 7
  %v59 = vsub.s32 1, %v58
  %v60 = vrot.slane %v51, %v59
  %vm63 = vcmask 31744
  %v65 = vsel %vm63, %v45, 0
  %vm67 = vcmask 1043456
  %v69 = vsel %vm67, %v48, 0
  %v72 = vsel %vm67, %v49, 0
  %74 = vmatprep.subr.mxu0 %v72
  %75 = vmatpush1.msra.mxu0 %v69
  %76 = vmatprep.subr.mxu0 0.0
  %77 = vmatpush1.msra.mxu0 0.0
  %78 = vmatprep.subr.mxu0 0.0
  %79 = vmatpush1.msra.mxu0 0.0
  %80 = vmatprep.subr.mxu0 0.0
  %81 = vmatpush1.msra.mxu0 0.0
  %82 = vmatprep.subr.mxu0 0.0
  %83 = vmatpush1.msra.mxu0 0.0
  %84 = vmatprep.subr.mxu0 0.0
  %85 = vmatpush1.msra.mxu0 0.0
  %86 = vmatprep.subr.mxu0 0.0
  %87 = vmatpush1.msra.mxu0 0.0
  %88 = vmatprep.subr.mxu0 0.0
  %89 = vmatpush1.msra.mxu0 0.0
  %90 = vmatprep.subr.mxu0 0.0
  %91 = vmatpush1.msra.mxu0 0.0
  %92 = vmatprep.subr.mxu0 0.0
  %93 = vmatpush1.msra.mxu0 0.0
  %94 = vmatprep.subr.mxu0 0.0
  %95 = vmatpush1.msra.mxu0 0.0
  %96 = vmatprep.subr.mxu0 0.0
  %97 = vmatpush1.msra.mxu0 0.0
  %98 = vmatprep.subr.mxu0 0.0
  %99 = vmatpush1.msra.mxu0 0.0
  %100 = vmatprep.subr.mxu0 0.0
  %101 = vmatpush1.msra.mxu0 0.0
  %102 = vmatprep.subr.mxu0 0.0
  %103 = vmatpush1.msra.mxu0 0.0
  %104 = vmatprep.subr.mxu0 0.0
  %105 = vmatpush1.msra.mxu0 0.0
  %106 = vmatprep.subr.mxu0 0.0
  %107 = vmatpush1.msra.mxu0 0.0
  %108 = vmatprep.subr.mxu0 0.0
  %109 = vmatpush1.msra.mxu0 0.0
  %110 = vmatprep.subr.mxu0 0.0
  %111 = vmatpush1.msra.mxu0 0.0
  %112 = vmatprep.subr.mxu0 0.0
  %113 = vmatpush1.msra.mxu0 0.0
  %114 = vmatprep.subr.mxu0 0.0
  %115 = vmatpush1.msra.mxu0 0.0
  %116 = vmatprep.subr.mxu0 0.0
  %117 = vmatpush1.msra.mxu0 0.0
  %118 = vmatprep.subr.mxu0 0.0
  %119 = vmatpush1.msra.mxu0 0.0
  %120 = vmatprep.subr.mxu0 0.0
  %121 = vmatpush1.msra.mxu0 0.0
  %122 = vmatprep.subr.mxu0 0.0
  %123 = vmatpush1.msra.mxu0 0.0
  %124 = vmatprep.subr.mxu0 0.0
  %125 = vmatpush1.msra.mxu0 0.0
  %126 = vmatprep.subr.mxu0 0.0
  %127 = vmatpush1.msra.mxu0 0.0
  %128 = vmatprep.subr.mxu0 0.0
  %129 = vmatpush1.msra.mxu0 0.0
  %130 = vmatprep.subr.mxu0 0.0
  %131 = vmatpush1.msra.mxu0 0.0
  %132 = vmatprep.subr.mxu0 0.0
  %133 = vmatpush1.msra.mxu0 0.0
  %134 = vmatprep.subr.mxu0 0.0
  %135 = vmatpush1.msra.mxu0 0.0
  %136 = vmatprep.subr.mxu0 0.0
  %137 = vmatpush1.msra.mxu0 0.0
  %138 = vmatprep.mubr.f32.mxu0 0.0
  %139 = vmatmul.mubr.f32.gmra.mrb[0].mxu0 %v65
  %v140 = vpop.f32.mrb[0].mxu0
  %v141 = vadd.f32 %v56, %v140
  %v142 = vpop.f32.mrb[0].mxu0
  %v143 = vadd.f32 %v60, %v142
  %144 = vdwg.mxu0
  %v145 = vmax.f32 %v143, 0.0
  %v146 = vld [vmem:[%s1 + $0x20] sm:$0xff]
  %v147 = vld [vmem:[%s1 + $0x30] sm:$0xff]
  %v148 = vld [vmem:[%s1 + $0x40] sm:$0xff]
  %v149 = vld [vmem:[%s1 + $0x50] sm:$0xff]
  %v150 = vld [vmem:[%s1 + $0x60] ss:$0 sm:$0xff]
  %vm151 = vcmask 261120
  %v153 = vsel %vm151, %v145, 0
  %155 = vmatprep.subr.mxu0 0.0
  %156 = vmatpush1.msra.mxu0 %v146
  %157 = vmatprep.subr.mxu0 0.0
  %158 = vmatpush1.msra.mxu0 %v147
  %159 = vmatprep.subr.mxu0 0.0
  %160 = vmatpush1.msra.mxu0 %v148
  %161 = vmatprep.subr.mxu0 0.0
  %162 = vmatpush1.msra.mxu0 %v149
  %163 = vmatprep.subr.mxu0 0.0
  %164 = vmatpush1.msra.mxu0 0.0
  %165 = vmatprep.subr.mxu0 0.0
  %166 = vmatpush1.msra.mxu0 0.0
  %167 = vmatprep.subr.mxu0 0.0
  %168 = vmatpush1.msra.mxu0 0.0
  %169 = vmatprep.subr.mxu0 0.0
  %170 = vmatpush1.msra.mxu0 0.0
  %171 = vmatprep.subr.mxu0 0.0
  %172 = vmatpush1.msra.mxu0 0.0
  %173 = vmatprep.subr.mxu0 0.0
  %174 = vmatpush1.msra.mxu0 0.0
  %175 = vmatprep.subr.mxu0 0.0
  %176 = vmatpush1.msra.mxu0 0.0
  %177 = vmatprep.subr.mxu0 0.0
  %178 = vmatpush1.msra.mxu0 0.0
  %179 = vmatprep.subr.mxu0 0.0
  %180 = vmatpush1.msra.mxu0 0.0
  %181 = vmatprep.subr.mxu0 0.0
  %182 = vmatpush1.msra.mxu0 0.0
  %183 = vmatprep.subr.mxu0 0.0
  %184 = vmatpush1.msra.mxu0 0.0
  %185 = vmatprep.subr.mxu0 0.0
  %186 = vmatpush1.msra.mxu0 0.0
  %187 = vmatprep.subr.mxu0 0.0
  %188 = vmatpush1.msra.mxu0 0.0
  %189 = vmatprep.subr.mxu0 0.0
  %190 = vmatpush1.msra.mxu0 0.0
  %191 = vmatprep.subr.mxu0 0.0
  %192 = vmatpush1.msra.mxu0 0.0
  %193 = vmatprep.subr.mxu0 0.0
  %194 = vmatpush1.msra.mxu0 0.0
  %195 = vmatprep.subr.mxu0 0.0
  %196 = vmatpush1.msra.mxu0 0.0
  %197 = vmatprep.subr.mxu0 0.0
  %198 = vmatpush1.msra.mxu0 0.0
  %199 = vmatprep.subr.mxu0 0.0
  %200 = vmatpush1.msra.mxu0 0.0
  %201 = vmatprep.subr.mxu0 0.0
  %202 = vmatpush1.msra.mxu0 0.0
  %203 = vmatprep.subr.mxu0 0.0
  %204 = vmatpush1.msra.mxu0 0.0
  %205 = vmatprep.subr.mxu0 0.0
  %206 = vmatpush1.msra.mxu0 0.0
  %207 = vmatprep.subr.mxu0 0.0
  %208 = vmatpush1.msra.mxu0 0.0
  %209 = vmatprep.subr.mxu0 0.0
  %210 = vmatpush1.msra.mxu0 0.0
  %211 = vmatprep.subr.mxu0 0.0
  %212 = vmatpush1.msra.mxu0 0.0
  %213 = vmatprep.subr.mxu0 0.0
  %214 = vmatpush1.msra.mxu0 0.0
  %215 = vmatprep.subr.mxu0 0.0
  %216 = vmatpush1.msra.mxu0 0.0
  %217 = vmatprep.subr.mxu0 0.0
  %218 = vmatpush1.msra.mxu0 0.0
  %219 = vmatprep.mubr.f32.mxu0 0.0
  %220 = vmatmul.mubr.f32.gmra.mrb[0].mxu0 %v153
  %v221 = vpop.f32.mrb[0].mxu0
  %v222 = vadd.f32 %v150, %v221
  %v223 = vpop.f32.mrb[0].mxu0
  %224 = vdwg.mxu0
  %v225 = vmax.f32 %v222, 0.0
  %v226 = vld [vmem:[%s1 + $0x70] sm:$0xff]
  %v227 = vld [vmem:[%s1 + $0x78] sm:$0xff]
  %v228 = vld [vmem:[%s1 + $0x80] sm:$0xff]
  %v229 = vld [vmem:[%s1 + $0x88] sm:$0xff]
  %v230 = vld [vmem:[%s1 + $0x90] sm:$0xff]
  %v231 = vld [vmem:[%s1 + $0x98] sm:$0xff]
  %v232 = vld [vmem:[%s1 + $0xa0] sm:$0xff]
  %v233 = vld [vmem:[%s1 + $0xa8] sm:$0xff]
  %s234 = scalar_lea.vmem %s1, 176
  %v235 = vld [vmem:[%s234] ss:$8 sm:$0x3]
  %v237 = vlaneseq
  %v238 = vshrl.u32 %v237, 7
  %v239 = vsub.s32 0, %v238
  %v240 = vrot.slane %v235, %v239
  %v241 = vlaneseq
  %v242 = vshrl.u32 %v241, 7
  %v243 = vsub.s32 1, %v242
  %v244 = vrot.slane %v235, %v243
  %v248 = vsel %vm151, %v225, 0
  %250 = vmatprep.subr.mxu0 %v227
  %251 = vmatpush1.msra.mxu0 %v226
  %252 = vmatprep.subr.mxu0 %v229
  %253 = vmatpush1.msra.mxu0 %v228
  %254 = vmatprep.subr.mxu0 %v231
  %255 = vmatpush1.msra.mxu0 %v230
  %256 = vmatprep.subr.mxu0 %v233
  %257 = vmatpush1.msra.mxu0 %v232
  %258 = vmatprep.subr.mxu0 0.0
  %259 = vmatpush1.msra.mxu0 0.0
  %260 = vmatprep.subr.mxu0 0.0
  %261 = vmatpush1.msra.mxu0 0.0
  %262 = vmatprep.subr.mxu0 0.0
  %263 = vmatpush1.msra.mxu0 0.0
  %264 = vmatprep.subr.mxu0 0.0
  %265 = vmatpush1.msra.mxu0 0.0
  %266 = vmatprep.subr.mxu0 0.0
  %267 = vmatpush1.msra.mxu0 0.0
  %268 = vmatprep.subr.mxu0 0.0
  %269 = vmatpush1.msra.mxu0 0.0
  %270 = vmatprep.subr.mxu0 0.0
  %271 = vmatpush1.msra.mxu0 0.0
  %272 = vmatprep.subr.mxu0 0.0
  %273 = vmatpush1.msra.mxu0 0.0
  %274 = vmatprep.subr.mxu0 0.0
  %275 = vmatpush1.msra.mxu0 0.0
  %276 = vmatprep.subr.mxu0 0.0
  %277 = vmatpush1.msra.mxu0 0.0
  %278 = vmatprep.subr.mxu0 0.0
  %279 = vmatpush1.msra.mxu0 0.0
  %280 = vmatprep.subr.mxu0 0.0
  %281 = vmatpush1.msra.mxu0 0.0
  %282 = vmatprep.subr.mxu0 0.0
  %283 = vmatpush1.msra.mxu0 0.0
  %284 = vmatprep.subr.mxu0 0.0
  %285 = vmatpush1.msra.mxu0 0.0
  %286 = vmatprep.subr.mxu0 0.0
  %287 = vmatpush1.msra.mxu0 0.0
  %288 = vmatprep.subr.mxu0 0.0
  %289 = vmatpush1.msra.mxu0 0.0
  %290 = vmatprep.subr.mxu0 0.0
  %291 = vmatpush1.msra.mxu0 0.0
  %292 = vmatprep.subr.mxu0 0.0
  %293 = vmatpush1.msra.mxu0 0.0
  %294 = vmatprep.subr.mxu0 0.0
  %295 = vmatpush1.msra.mxu0 0.0
  %296 = vmatprep.subr.mxu0 0.0
  %297 = vmatpush1.msra.mxu0 0.0
  %298 = vmatprep.subr.mxu0 0.0
  %299 = vmatpush1.msra.mxu0 0.0
  %300 = vmatprep.subr.mxu0 0.0
  %301 = vmatpush1.msra.mxu0 0.0
  %302 = vmatprep.subr.mxu0 0.0
  %303 = vmatpush1.msra.mxu0 0.0
  %304 = vmatprep.subr.mxu0 0.0
  %305 = vmatpush1.msra.mxu0 0.0
  %306 = vmatprep.subr.mxu0 0.0
  %307 = vmatpush1.msra.mxu0 0.0
  %308 = vmatprep.subr.mxu0 0.0
  %309 = vmatpush1.msra.mxu0 0.0
  %310 = vmatprep.subr.mxu0 0.0
  %311 = vmatpush1.msra.mxu0 0.0
  %312 = vmatprep.subr.mxu0 0.0
  %313 = vmatpush1.msra.mxu0 0.0
  %314 = vmatprep.mubr.f32.mxu0 0.0
  %315 = vmatmul.mubr.f32.gmra.mrb[0].mxu0 %v248
  %v316 = vpop.f32.mrb[0].mxu0
  %v317 = vadd.f32 %v240, %v316
  %v318 = vpop.f32.mrb[0].mxu0
  %v319 = vadd.f32 %v244, %v318
  %320 = vdwg.mxu0
  %322 = vset.pattern.permute.xlu0 0
  %323 = vperm.xlu0 %322, %v11
  %v324 = vpop.permute.xlu0 %323
  %327 = vset.pattern.permute.xlu0 0
  %328 = vperm.xlu0 %327, %v12
  %v329 = vpop.permute.xlu0 %328
  %332 = vset.pattern.permute.xlu0 0
  %333 = vperm.xlu0 %332, %v13
  %v334 = vpop.permute.xlu0 %333
  %337 = vset.pattern.permute.xlu0 0
  %338 = vperm.xlu0 %337, %v14
  %v339 = vpop.permute.xlu0 %338
  %342 = vset.pattern.permute.xlu0 0
  %343 = vperm.xlu0 %342, %v15
  %v344 = vpop.permute.xlu0 %343
  %347 = vset.pattern.permute.xlu0 0
  %348 = vperm.xlu0 %347, %v16
  %v349 = vpop.permute.xlu0 %348
  %352 = vset.pattern.permute.xlu0 0
  %353 = vperm.xlu0 %352, %v17
  %v354 = vpop.permute.xlu0 %353
  %357 = vset.pattern.permute.xlu0 0
  %358 = vperm.xlu0 %357, %v18
  %v359 = vpop.permute.xlu0 %358
  %362 = vset.pattern.permute.xlu0 0
  %363 = vperm.xlu0 %362, %v19
  %v364 = vpop.permute.xlu0 %363
  %367 = vset.pattern.permute.xlu0 0
  %368 = vperm.xlu0 %367, %v20
  %v369 = vpop.permute.xlu0 %368
  %372 = vset.pattern.permute.xlu0 0
  %373 = vperm.xlu0 %372, %v21
  %v374 = vpop.permute.xlu0 %373
  %377 = vset.pattern.permute.xlu0 0
  %378 = vperm.xlu0 %377, %v22
  %v379 = vpop.permute.xlu0 %378
  %382 = vset.pattern.permute.xlu0 0
  %383 = vperm.xlu0 %382, %v23
  %v384 = vpop.permute.xlu0 %383
  %387 = vset.pattern.permute.xlu0 0
  %388 = vperm.xlu0 %387, %v24
  %v389 = vpop.permute.xlu0 %388
  %392 = vset.pattern.permute.xlu0 0
  %393 = vperm.xlu0 %392, %v25
  %v394 = vpop.permute.xlu0 %393
  %397 = vset.pattern.permute.xlu0 0
  %398 = vperm.xlu0 %397, %v26
  %v399 = vpop.permute.xlu0 %398
  %402 = vset.pattern.permute.xlu0 0
  %403 = vperm.xlu0 %402, %v27
  %v404 = vpop.permute.xlu0 %403
  %v406 = vmul.f32 %v324, %v141
  %v407 = vmul.f32 %v329, %v141
  %v408 = vmul.f32 %v334, %v141
  %v409 = vmul.f32 %v339, %v141
  %v410 = vmul.f32 %v344, %v141
  %v411 = vmul.f32 %v349, %v141
  %v412 = vmul.f32 %v354, %v141
  %v413 = vmul.f32 %v359, %v141
  %v414 = vmul.f32 %v364, %v141
  %v415 = vmul.f32 %v369, %v141
  %v416 = vmul.f32 %v374, %v141
  %v417 = vmul.f32 %v379, %v141
  %v418 = vmul.f32 %v384, %v141
  %v419 = vmul.f32 %v389, %v141
  %v420 = vmul.f32 %v394, %v141
  %v421 = vmul.f32 %v399, %v141
  %v422 = vmul.f32 %v404, %v141
  %v423 = vadd.f32 %v317, %v406
  %v424 = vadd.f32 %v317, %v407
  %v425 = vadd.f32 %v317, %v408
  %v426 = vadd.f32 %v317, %v409
  %v427 = vadd.f32 %v317, %v410
  %v428 = vadd.f32 %v317, %v411
  %v429 = vadd.f32 %v317, %v412
  %v430 = vadd.f32 %v317, %v413
  %v431 = vadd.f32 %v317, %v414
  %v432 = vadd.f32 %v317, %v415
  %v433 = vadd.f32 %v317, %v416
  %v434 = vadd.f32 %v317, %v417
  %v435 = vadd.f32 %v317, %v418
  %v436 = vadd.f32 %v317, %v419
  %v437 = vadd.f32 %v317, %v420
  %v438 = vadd.f32 %v317, %v421
  %v439 = vadd.f32 %v317, %v422
  %vm440 = vcmp.gt.f32.partialorder %v423, 0.0
  %vm441 = vcmp.gt.f32.partialorder %v424, 0.0
  %vm442 = vcmp.gt.f32.partialorder %v425, 0.0
  %vm443 = vcmp.gt.f32.partialorder %v426, 0.0
  %vm444 = vcmp.gt.f32.partialorder %v427, 0.0
  %vm445 = vcmp.gt.f32.partialorder %v428, 0.0
  %vm446 = vcmp.gt.f32.partialorder %v429, 0.0
  %vm447 = vcmp.gt.f32.partialorder %v430, 0.0
  %vm448 = vcmp.gt.f32.partialorder %v431, 0.0
  %vm449 = vcmp.gt.f32.partialorder %v432, 0.0
  %vm450 = vcmp.gt.f32.partialorder %v433, 0.0
  %vm451 = vcmp.gt.f32.partialorder %v434, 0.0
  %vm452 = vcmp.gt.f32.partialorder %v435, 0.0
  %vm453 = vcmp.gt.f32.partialorder %v436, 0.0
  %vm454 = vcmp.gt.f32.partialorder %v437, 0.0
  %vm455 = vcmp.gt.f32.partialorder %v438, 0.0
  %vm456 = vcmp.gt.f32.partialorder %v439, 0.0
  %v457 = vmul.f32 %v423, 1.442695
  %v458 = vpow.pop %v457
  %v459 = vmul.f32 %v424, 1.442695
  %v460 = vpow.pop %v459
  %v461 = vmul.f32 %v425, 1.442695
  %v462 = vpow.pop %v461
  %v463 = vmul.f32 %v426, 1.442695
  %v464 = vpow.pop %v463
  %v465 = vmul.f32 %v427, 1.442695
  %v466 = vpow.pop %v465
  %v467 = vmul.f32 %v428, 1.442695
  %v468 = vpow.pop %v467
  %v469 = vmul.f32 %v429, 1.442695
  %v470 = vpow.pop %v469
  %v471 = vmul.f32 %v430, 1.442695
  %v472 = vpow.pop %v471
  %v473 = vmul.f32 %v431, 1.442695
  %v474 = vpow.pop %v473
  %v475 = vmul.f32 %v432, 1.442695
  %v476 = vpow.pop %v475
  %v477 = vmul.f32 %v433, 1.442695
  %v478 = vpow.pop %v477
  %v479 = vmul.f32 %v434, 1.442695
  %v480 = vpow.pop %v479
  %v481 = vmul.f32 %v435, 1.442695
  %v482 = vpow.pop %v481
  %v483 = vmul.f32 %v436, 1.442695
  %v484 = vpow.pop %v483
  %v485 = vmul.f32 %v437, 1.442695
  %v486 = vpow.pop %v485
  %v487 = vmul.f32 %v438, 1.442695
  %v488 = vpow.pop %v487
  %v489 = vmul.f32 %v439, 1.442695
  %v490 = vpow.pop %v489
  %v491 = vsub.f32 %v458, 1.0
  %v492 = vsub.f32 %v460, 1.0
  %v493 = vsub.f32 %v462, 1.0
  %v494 = vsub.f32 %v464, 1.0
  %v495 = vsub.f32 %v466, 1.0
  %v496 = vsub.f32 %v468, 1.0
  %v497 = vsub.f32 %v470, 1.0
  %v498 = vsub.f32 %v472, 1.0
  %v499 = vsub.f32 %v474, 1.0
  %v500 = vsub.f32 %v476, 1.0
  %v501 = vsub.f32 %v478, 1.0
  %v502 = vsub.f32 %v480, 1.0
  %v503 = vsub.f32 %v482, 1.0
  %v504 = vsub.f32 %v484, 1.0
  %v505 = vsub.f32 %v486, 1.0
  %v506 = vsub.f32 %v488, 1.0
  %v507 = vsub.f32 %v490, 1.0
  %v508 = vsel %vm440, %v423, %v491
  %v509 = vsel %vm441, %v424, %v492
  %v510 = vsel %vm442, %v425, %v493
  %v511 = vsel %vm443, %v426, %v494
  %v512 = vsel %vm444, %v427, %v495
  %v513 = vsel %vm445, %v428, %v496
  %v514 = vsel %vm446, %v429, %v497
  %v515 = vsel %vm447, %v430, %v498
  %v516 = vsel %vm448, %v431, %v499
  %v517 = vsel %vm449, %v432, %v500
  %v518 = vsel %vm450, %v433, %v501
  %v519 = vsel %vm451, %v434, %v502
  %v520 = vsel %vm452, %v435, %v503
  %v521 = vsel %vm453, %v436, %v504
  %v522 = vsel %vm454, %v437, %v505
  %v523 = vsel %vm455, %v438, %v506
  %v524 = vsel %vm456, %v439, %v507
  %v525 = vld [vmem:[%s1 + $0xc0] sm:$0xff]
  %v526 = vld [vmem:[%s1 + $0xd0] sm:$0xff]
  %v527 = vld [vmem:[%s1 + $0xe0] sm:$0xff]
  %v528 = vld [vmem:[%s1 + $0xf0] sm:$0xff]
  %v529 = vld [vmem:[%s1 + $0x100] sm:$0xff]
  %v530 = vld [vmem:[%s1 + $0x110] sm:$0xff]
  %v531 = vld [vmem:[%s1 + $0x120] sm:$0xff]
  %v532 = vld [vmem:[%s1 + $0x130] sm:$0xff]
  %v533 = vld [vmem:[%s1 + $0x140] sm:$0xff]
  %v534 = vld [vmem:[%s1 + $0x150] sm:$0xff]
  %v535 = vld [vmem:[%s1 + $0x160] sm:$0xff]
  %v536 = vld [vmem:[%s1 + $0x170] sm:$0xff]
  %v537 = vld [vmem:[%s1 + $0x180] sm:$0xff]
  %v538 = vld [vmem:[%s1 + $0x190] sm:$0xff]
  %v539 = vld [vmem:[%s1 + $0x1a0] sm:$0xff]
  %v540 = vld [vmem:[%s1 + $0x1b0] sm:$0xff]
  %v541 = vld [vmem:[%s1 + $0x1c0] ss:$0 sm:$0xff]
  %542 = vmatprep.subr.mxu0 0.0
  %543 = vmatpush1.msra.mxu0 %v525
  %544 = vmatprep.subr.mxu0 0.0
  %545 = vmatpush1.msra.mxu0 %v526
  %546 = vmatprep.subr.mxu0 0.0
  %547 = vmatpush1.msra.mxu0 %v527
  %548 = vmatprep.subr.mxu0 0.0
  %549 = vmatpush1.msra.mxu0 %v528
  %550 = vmatprep.subr.mxu0 0.0
  %551 = vmatpush1.msra.mxu0 %v529
  %552 = vmatprep.subr.mxu0 0.0
  %553 = vmatpush1.msra.mxu0 %v530
  %554 = vmatprep.subr.mxu0 0.0
  %555 = vmatpush1.msra.mxu0 %v531
  %556 = vmatprep.subr.mxu0 0.0
  %557 = vmatpush1.msra.mxu0 %v532
  %558 = vmatprep.subr.mxu0 0.0
  %559 = vmatpush1.msra.mxu0 %v533
  %560 = vmatprep.subr.mxu0 0.0
  %561 = vmatpush1.msra.mxu0 %v534
  %562 = vmatprep.subr.mxu0 0.0
  %563 = vmatpush1.msra.mxu0 %v535
  %564 = vmatprep.subr.mxu0 0.0
  %565 = vmatpush1.msra.mxu0 %v536
  %566 = vmatprep.subr.mxu0 0.0
  %567 = vmatpush1.msra.mxu0 %v537
  %568 = vmatprep.subr.mxu0 0.0
  %569 = vmatpush1.msra.mxu0 %v538
  %570 = vmatprep.subr.mxu0 0.0
  %571 = vmatpush1.msra.mxu0 %v539
  %572 = vmatprep.subr.mxu0 0.0
  %573 = vmatpush1.msra.mxu0 %v540
  %574 = vmatprep.subr.mxu0 0.0
  %575 = vmatpush1.msra.mxu0 0.0
  %576 = vmatprep.subr.mxu0 0.0
  %577 = vmatpush1.msra.mxu0 0.0
  %578 = vmatprep.subr.mxu0 0.0
  %579 = vmatpush1.msra.mxu0 0.0
  %580 = vmatprep.subr.mxu0 0.0
  %581 = vmatpush1.msra.mxu0 0.0
  %582 = vmatprep.subr.mxu0 0.0
  %583 = vmatpush1.msra.mxu0 0.0
  %584 = vmatprep.subr.mxu0 0.0
  %585 = vmatpush1.msra.mxu0 0.0
  %586 = vmatprep.subr.mxu0 0.0
  %587 = vmatpush1.msra.mxu0 0.0
  %588 = vmatprep.subr.mxu0 0.0
  %589 = vmatpush1.msra.mxu0 0.0
  %590 = vmatprep.subr.mxu0 0.0
  %591 = vmatpush1.msra.mxu0 0.0
  %592 = vmatprep.subr.mxu0 0.0
  %593 = vmatpush1.msra.mxu0 0.0
  %594 = vmatprep.subr.mxu0 0.0
  %595 = vmatpush1.msra.mxu0 0.0
  %596 = vmatprep.subr.mxu0 0.0
  %597 = vmatpush1.msra.mxu0 0.0
  %598 = vmatprep.subr.mxu0 0.0
  %599 = vmatpush1.msra.mxu0 0.0
  %600 = vmatprep.subr.mxu0 0.0
  %601 = vmatpush1.msra.mxu0 0.0
  %602 = vmatprep.subr.mxu0 0.0
  %603 = vmatpush1.msra.mxu0 0.0
  %604 = vmatprep.subr.mxu0 0.0
  %605 = vmatpush1.msra.mxu0 0.0
  %606 = vmatprep.mubr.f32.mxu0 0.0
  %607 = vmatmul.mubr.f32.gmra.mrb[0].mxu0 %v508
  %v608 = vpop.f32.mrb[0].mxu0
  %v609 = vadd.f32 %v541, %v608
  %v610 = vpop.f32.mrb[0].mxu0
  %611 = vmatprep.mubr.f32.mxu0 0.0
  %612 = vmatmul.mubr.f32.gmra.mrb[0].mxu0 %v509
  %v613 = vpop.f32.mrb[0].mxu0
  %v614 = vadd.f32 %v541, %v613
  %v615 = vpop.f32.mrb[0].mxu0
  %616 = vmatprep.mubr.f32.mxu0 0.0
  %617 = vmatmul.mubr.f32.gmra.mrb[0].mxu0 %v510
  %v618 = vpop.f32.mrb[0].mxu0
  %v619 = vadd.f32 %v541, %v618
  %v620 = vpop.f32.mrb[0].mxu0
  %621 = vmatprep.mubr.f32.mxu0 0.0
  %622 = vmatmul.mubr.f32.gmra.mrb[0].mxu0 %v511
  %v623 = vpop.f32.mrb[0].mxu0
  %v624 = vadd.f32 %v541, %v623
  %v625 = vpop.f32.mrb[0].mxu0
  %626 = vmatprep.mubr.f32.mxu0 0.0
  %627 = vmatmul.mubr.f32.gmra.mrb[0].mxu0 %v512
  %v628 = vpop.f32.mrb[0].mxu0
  %v629 = vadd.f32 %v541, %v628
  %v630 = vpop.f32.mrb[0].mxu0
  %631 = vmatprep.mubr.f32.mxu0 0.0
  %632 = vmatmul.mubr.f32.gmra.mrb[0].mxu0 %v513
  %v633 = vpop.f32.mrb[0].mxu0
  %v634 = vadd.f32 %v541, %v633
  %v635 = vpop.f32.mrb[0].mxu0
  %636 = vmatprep.mubr.f32.mxu0 0.0
  %637 = vmatmul.mubr.f32.gmra.mrb[0].mxu0 %v514
  %v638 = vpop.f32.mrb[0].mxu0
  %v639 = vadd.f32 %v541, %v638
  %v640 = vpop.f32.mrb[0].mxu0
  %641 = vmatprep.mubr.f32.mxu0 0.0
  %642 = vmatmul.mubr.f32.gmra.mrb[0].mxu0 %v515
  %v643 = vpop.f32.mrb[0].mxu0
  %v644 = vadd.f32 %v541, %v643
  %v645 = vpop.f32.mrb[0].mxu0
  %646 = vmatprep.mubr.f32.mxu0 0.0
  %647 = vmatmul.mubr.f32.gmra.mrb[0].mxu0 %v516
  %v648 = vpop.f32.mrb[0].mxu0
  %v649 = vadd.f32 %v541, %v648
  %v650 = vpop.f32.mrb[0].mxu0
  %651 = vmatprep.mubr.f32.mxu0 0.0
  %652 = vmatmul.mubr.f32.gmra.mrb[0].mxu0 %v517
  %v653 = vpop.f32.mrb[0].mxu0
  %v654 = vadd.f32 %v541, %v653
  %v655 = vpop.f32.mrb[0].mxu0
  %656 = vmatprep.mubr.f32.mxu0 0.0
  %657 = vmatmul.mubr.f32.gmra.mrb[0].mxu0 %v518
  %v658 = vpop.f32.mrb[0].mxu0
  %v659 = vadd.f32 %v541, %v658
  %v660 = vpop.f32.mrb[0].mxu0
  %661 = vmatprep.mubr.f32.mxu0 0.0
  %662 = vmatmul.mubr.f32.gmra.mrb[0].mxu0 %v519
  %v663 = vpop.f32.mrb[0].mxu0
  %v664 = vadd.f32 %v541, %v663
  %v665 = vpop.f32.mrb[0].mxu0
  %666 = vmatprep.mubr.f32.mxu0 0.0
  %667 = vmatmul.mubr.f32.gmra.mrb[0].mxu0 %v520
  %v668 = vpop.f32.mrb[0].mxu0
  %v669 = vadd.f32 %v541, %v668
  %v670 = vpop.f32.mrb[0].mxu0
  %671 = vmatprep.mubr.f32.mxu0 0.0
  %672 = vmatmul.mubr.f32.gmra.mrb[0].mxu0 %v521
  %v673 = vpop.f32.mrb[0].mxu0
  %v674 = vadd.f32 %v541, %v673
  %v675 = vpop.f32.mrb[0].mxu0
  %676 = vmatprep.mubr.f32.mxu0 0.0
  %677 = vmatmul.mubr.f32.gmra.mrb[0].mxu0 %v522
  %v678 = vpop.f32.mrb[0].mxu0
  %v679 = vadd.f32 %v541, %v678
  %v680 = vpop.f32.mrb[0].mxu0
  %681 = vmatprep.mubr.f32.mxu0 0.0
  %682 = vmatmul.mubr.f32.gmra.mrb[0].mxu0 %v523
  %v683 = vpop.f32.mrb[0].mxu0
  %v684 = vadd.f32 %v541, %v683
  %v685 = vpop.f32.mrb[0].mxu0
  %686 = vmatprep.mubr.f32.mxu0 0.0
  %687 = vmatmul.mubr.f32.gmra.mrb[0].mxu0 %v524
  %v688 = vpop.f32.mrb[0].mxu0
  %v689 = vadd.f32 %v541, %v688
  %v690 = vpop.f32.mrb[0].mxu0
  %691 = vdwg.mxu0
  %vm692 = vcmp.gt.f32.partialorder %v609, 0.0
  %vm693 = vcmp.gt.f32.partialorder %v614, 0.0
  %vm694 = vcmp.gt.f32.partialorder %v619, 0.0
  %vm695 = vcmp.gt.f32.partialorder %v624, 0.0
  %vm696 = vcmp.gt.f32.partialorder %v629, 0.0
  %vm697 = vcmp.gt.f32.partialorder %v634, 0.0
  %vm698 = vcmp.gt.f32.partialorder %v639, 0.0
  %vm699 = vcmp.gt.f32.partialorder %v644, 0.0
  %vm700 = vcmp.gt.f32.partialorder %v649, 0.0
  %vm701 = vcmp.gt.f32.partialorder %v654, 0.0
  %vm702 = vcmp.gt.f32.partialorder %v659, 0.0
  %vm703 = vcmp.gt.f32.partialorder %v664, 0.0
  %vm704 = vcmp.gt.f32.partialorder %v669, 0.0
  %vm705 = vcmp.gt.f32.partialorder %v674, 0.0
  %vm706 = vcmp.gt.f32.partialorder %v679, 0.0
  %vm707 = vcmp.gt.f32.partialorder %v684, 0.0
  %vm708 = vcmp.gt.f32.partialorder %v689, 0.0
  %v709 = vmul.f32 %v609, 1.442695
  %v710 = vpow.pop %v709
  %v711 = vmul.f32 %v614, 1.442695
  %v712 = vpow.pop %v711
  %v713 = vmul.f32 %v619, 1.442695
  %v714 = vpow.pop %v713
  %v715 = vmul.f32 %v624, 1.442695
  %v716 = vpow.pop %v715
  %v717 = vmul.f32 %v629, 1.442695
  %v718 = vpow.pop %v717
  %v719 = vmul.f32 %v634, 1.442695
  %v720 = vpow.pop %v719
  %v721 = vmul.f32 %v639, 1.442695
  %v722 = vpow.pop %v721
  %v723 = vmul.f32 %v644, 1.442695
  %v724 = vpow.pop %v723
  %v725 = vmul.f32 %v649, 1.442695
  %v726 = vpow.pop %v725
  %v727 = vmul.f32 %v654, 1.442695
  %v728 = vpow.pop %v727
  %v729 = vmul.f32 %v659, 1.442695
  %v730 = vpow.pop %v729
  %v731 = vmul.f32 %v664, 1.442695
  %v732 = vpow.pop %v731
  %v733 = vmul.f32 %v669, 1.442695
  %v734 = vpow.pop %v733
  %v735 = vmul.f32 %v674, 1.442695
  %v736 = vpow.pop %v735
  %v737 = vmul.f32 %v679, 1.442695
  %v738 = vpow.pop %v737
  %v739 = vmul.f32 %v684, 1.442695
  %v740 = vpow.pop %v739
  %v741 = vmul.f32 %v689, 1.442695
  %v742 = vpow.pop %v741
  %v743 = vsub.f32 %v710, 1.0
  %v744 = vsub.f32 %v712, 1.0
  %v745 = vsub.f32 %v714, 1.0
  %v746 = vsub.f32 %v716, 1.0
  %v747 = vsub.f32 %v718, 1.0
  %v748 = vsub.f32 %v720, 1.0
  %v749 = vsub.f32 %v722, 1.0
  %v750 = vsub.f32 %v724, 1.0
  %v751 = vsub.f32 %v726, 1.0
  %v752 = vsub.f32 %v728, 1.0
  %v753 = vsub.f32 %v730, 1.0
  %v754 = vsub.f32 %v732, 1.0
  %v755 = vsub.f32 %v734, 1.0
  %v756 = vsub.f32 %v736, 1.0
  %v757 = vsub.f32 %v738, 1.0
  %v758 = vsub.f32 %v740, 1.0
  %v759 = vsub.f32 %v742, 1.0
  %v760 = vsel %vm692, %v609, %v743
  %v761 = vsel %vm693, %v614, %v744
  %v762 = vsel %vm694, %v619, %v745
  %v763 = vsel %vm695, %v624, %v746
  %v764 = vsel %vm696, %v629, %v747
  %v765 = vsel %vm697, %v634, %v748
  %v766 = vsel %vm698, %v639, %v749
  %v767 = vsel %vm699, %v644, %v750
  %v768 = vsel %vm700, %v649, %v751
  %v769 = vsel %vm701, %v654, %v752
  %v770 = vsel %vm702, %v659, %v753
  %v771 = vsel %vm703, %v664, %v754
  %v772 = vsel %vm704, %v669, %v755
  %v773 = vsel %vm705, %v674, %v756
  %v774 = vsel %vm706, %v679, %v757
  %v775 = vsel %vm707, %v684, %v758
  %v776 = vsel %vm708, %v689, %v759
  %v777 = vld [vmem:[%s1 + $0x1d0] sm:$0xff]
  %v778 = vld [vmem:[%s1 + $0x1e0] sm:$0xff]
  %v779 = vld [vmem:[%s1 + $0x1f0] sm:$0xff]
  %v780 = vld [vmem:[%s1 + $0x200] sm:$0xff]
  %v781 = vld [vmem:[%s1 + $0x210] sm:$0xff]
  %v782 = vld [vmem:[%s1 + $0x220] sm:$0xff]
  %v783 = vld [vmem:[%s1 + $0x230] sm:$0xff]
  %v784 = vld [vmem:[%s1 + $0x240] sm:$0xff]
  %v785 = vld [vmem:[%s1 + $0x250] sm:$0xff]
  %v786 = vld [vmem:[%s1 + $0x260] sm:$0xff]
  %v787 = vld [vmem:[%s1 + $0x270] sm:$0xff]
  %v788 = vld [vmem:[%s1 + $0x280] sm:$0xff]
  %v789 = vld [vmem:[%s1 + $0x290] sm:$0xff]
  %v790 = vld [vmem:[%s1 + $0x2a0] sm:$0xff]
  %v791 = vld [vmem:[%s1 + $0x2b0] sm:$0xff]
  %v792 = vld [vmem:[%s1 + $0x2c0] sm:$0xff]
  %v793 = vld [vmem:[%s1 + $0x2d0] ss:$0 sm:$0xff]
  %794 = vmatprep.subr.mxu0 0.0
  %795 = vmatpush1.msra.mxu0 %v777
  %796 = vmatprep.subr.mxu0 0.0
  %797 = vmatpush1.msra.mxu0 %v778
  %798 = vmatprep.subr.mxu0 0.0
  %799 = vmatpush1.msra.mxu0 %v779
  %800 = vmatprep.subr.mxu0 0.0
  %801 = vmatpush1.msra.mxu0 %v780
  %802 = vmatprep.subr.mxu0 0.0
  %803 = vmatpush1.msra.mxu0 %v781
  %804 = vmatprep.subr.mxu0 0.0
  %805 = vmatpush1.msra.mxu0 %v782
  %806 = vmatprep.subr.mxu0 0.0
  %807 = vmatpush1.msra.mxu0 %v783
  %808 = vmatprep.subr.mxu0 0.0
  %809 = vmatpush1.msra.mxu0 %v784
  %810 = vmatprep.subr.mxu0 0.0
  %811 = vmatpush1.msra.mxu0 %v785
  %812 = vmatprep.subr.mxu0 0.0
  %813 = vmatpush1.msra.mxu0 %v786
  %814 = vmatprep.subr.mxu0 0.0
  %815 = vmatpush1.msra.mxu0 %v787
  %816 = vmatprep.subr.mxu0 0.0
  %817 = vmatpush1.msra.mxu0 %v788
  %818 = vmatprep.subr.mxu0 0.0
  %819 = vmatpush1.msra.mxu0 %v789
  %820 = vmatprep.subr.mxu0 0.0
  %821 = vmatpush1.msra.mxu0 %v790
  %822 = vmatprep.subr.mxu0 0.0
  %823 = vmatpush1.msra.mxu0 %v791
  %824 = vmatprep.subr.mxu0 0.0
  %825 = vmatpush1.msra.mxu0 %v792
  %826 = vmatprep.subr.mxu0 0.0
  %827 = vmatpush1.msra.mxu0 0.0
  %828 = vmatprep.subr.mxu0 0.0
  %829 = vmatpush1.msra.mxu0 0.0
  %830 = vmatprep.subr.mxu0 0.0
  %831 = vmatpush1.msra.mxu0 0.0
  %832 = vmatprep.subr.mxu0 0.0
  %833 = vmatpush1.msra.mxu0 0.0
  %834 = vmatprep.subr.mxu0 0.0
  %835 = vmatpush1.msra.mxu0 0.0
  %836 = vmatprep.subr.mxu0 0.0
  %837 = vmatpush1.msra.mxu0 0.0
  %838 = vmatprep.subr.mxu0 0.0
  %839 = vmatpush1.msra.mxu0 0.0
  %840 = vmatprep.subr.mxu0 0.0
  %841 = vmatpush1.msra.mxu0 0.0
  %842 = vmatprep.subr.mxu0 0.0
  %843 = vmatpush1.msra.mxu0 0.0
  %844 = vmatprep.subr.mxu0 0.0
  %845 = vmatpush1.msra.mxu0 0.0
  %846 = vmatprep.subr.mxu0 0.0
  %847 = vmatpush1.msra.mxu0 0.0
  %848 = vmatprep.subr.mxu0 0.0
  %849 = vmatpush1.msra.mxu0 0.0
  %850 = vmatprep.subr.mxu0 0.0
  %851 = vmatpush1.msra.mxu0 0.0
  %852 = vmatprep.subr.mxu0 0.0
  %853 = vmatpush1.msra.mxu0 0.0
  %854 = vmatprep.subr.mxu0 0.0
  %855 = vmatpush1.msra.mxu0 0.0
  %856 = vmatprep.subr.mxu0 0.0
  %857 = vmatpush1.msra.mxu0 0.0
  %858 = vmatprep.mubr.f32.mxu0 0.0
  %859 = vmatmul.mubr.f32.gmra.mrb[0].mxu0 %v760
  %v860 = vpop.f32.mrb[0].mxu0
  %v861 = vadd.f32 %v793, %v860
  %v862 = vpop.f32.mrb[0].mxu0
  %863 = vmatprep.mubr.f32.mxu0 0.0
  %864 = vmatmul.mubr.f32.gmra.mrb[0].mxu0 %v761
  %v865 = vpop.f32.mrb[0].mxu0
  %v866 = vadd.f32 %v793, %v865
  %v867 = vpop.f32.mrb[0].mxu0
  %868 = vmatprep.mubr.f32.mxu0 0.0
  %869 = vmatmul.mubr.f32.gmra.mrb[0].mxu0 %v762
  %v870 = vpop.f32.mrb[0].mxu0
  %v871 = vadd.f32 %v793, %v870
  %v872 = vpop.f32.mrb[0].mxu0
  %873 = vmatprep.mubr.f32.mxu0 0.0
  %874 = vmatmul.mubr.f32.gmra.mrb[0].mxu0 %v763
  %v875 = vpop.f32.mrb[0].mxu0
  %v876 = vadd.f32 %v793, %v875
  %v877 = vpop.f32.mrb[0].mxu0
  %878 = vmatprep.mubr.f32.mxu0 0.0
  %879 = vmatmul.mubr.f32.gmra.mrb[0].mxu0 %v764
  %v880 = vpop.f32.mrb[0].mxu0
  %v881 = vadd.f32 %v793, %v880
  %v882 = vpop.f32.mrb[0].mxu0
  %883 = vmatprep.mubr.f32.mxu0 0.0
  %884 = vmatmul.mubr.f32.gmra.mrb[0].mxu0 %v765
  %v885 = vpop.f32.mrb[0].mxu0
  %v886 = vadd.f32 %v793, %v885
  %v887 = vpop.f32.mrb[0].mxu0
  %888 = vmatprep.mubr.f32.mxu0 0.0
  %889 = vmatmul.mubr.f32.gmra.mrb[0].mxu0 %v766
  %v890 = vpop.f32.mrb[0].mxu0
  %v891 = vadd.f32 %v793, %v890
  %v892 = vpop.f32.mrb[0].mxu0
  %893 = vmatprep.mubr.f32.mxu0 0.0
  %894 = vmatmul.mubr.f32.gmra.mrb[0].mxu0 %v767
  %v895 = vpop.f32.mrb[0].mxu0
  %v896 = vadd.f32 %v793, %v895
  %v897 = vpop.f32.mrb[0].mxu0
  %898 = vmatprep.mubr.f32.mxu0 0.0
  %899 = vmatmul.mubr.f32.gmra.mrb[0].mxu0 %v768
  %v900 = vpop.f32.mrb[0].mxu0
  %v901 = vadd.f32 %v793, %v900
  %v902 = vpop.f32.mrb[0].mxu0
  %903 = vmatprep.mubr.f32.mxu0 0.0
  %904 = vmatmul.mubr.f32.gmra.mrb[0].mxu0 %v769
  %v905 = vpop.f32.mrb[0].mxu0
  %v906 = vadd.f32 %v793, %v905
  %v907 = vpop.f32.mrb[0].mxu0
  %908 = vmatprep.mubr.f32.mxu0 0.0
  %909 = vmatmul.mubr.f32.gmra.mrb[0].mxu0 %v770
  %v910 = vpop.f32.mrb[0].mxu0
  %v911 = vadd.f32 %v793, %v910
  %v912 = vpop.f32.mrb[0].mxu0
  %913 = vmatprep.mubr.f32.mxu0 0.0
  %914 = vmatmul.mubr.f32.gmra.mrb[0].mxu0 %v771
  %v915 = vpop.f32.mrb[0].mxu0
  %v916 = vadd.f32 %v793, %v915
  %v917 = vpop.f32.mrb[0].mxu0
  %918 = vmatprep.mubr.f32.mxu0 0.0
  %919 = vmatmul.mubr.f32.gmra.mrb[0].mxu0 %v772
  %v920 = vpop.f32.mrb[0].mxu0
  %v921 = vadd.f32 %v793, %v920
  %v922 = vpop.f32.mrb[0].mxu0
  %923 = vmatprep.mubr.f32.mxu0 0.0
  %924 = vmatmul.mubr.f32.gmra.mrb[0].mxu0 %v773
  %v925 = vpop.f32.mrb[0].mxu0
  %v926 = vadd.f32 %v793, %v925
  %v927 = vpop.f32.mrb[0].mxu0
  %928 = vmatprep.mubr.f32.mxu0 0.0
  %929 = vmatmul.mubr.f32.gmra.mrb[0].mxu0 %v774
  %v930 = vpop.f32.mrb[0].mxu0
  %v931 = vadd.f32 %v793, %v930
  %v932 = vpop.f32.mrb[0].mxu0
  %933 = vmatprep.mubr.f32.mxu0 0.0
  %934 = vmatmul.mubr.f32.gmra.mrb[0].mxu0 %v775
  %v935 = vpop.f32.mrb[0].mxu0
  %v936 = vadd.f32 %v793, %v935
  %v937 = vpop.f32.mrb[0].mxu0
  %938 = vmatprep.mubr.f32.mxu0 0.0
  %939 = vmatmul.mubr.f32.gmra.mrb[0].mxu0 %v776
  %v940 = vpop.f32.mrb[0].mxu0
  %v941 = vadd.f32 %v793, %v940
  %v942 = vpop.f32.mrb[0].mxu0
  %943 = vdwg.mxu0
  %vm944 = vcmp.gt.f32.partialorder %v861, 0.0
  %vm945 = vcmp.gt.f32.partialorder %v866, 0.0
  %vm946 = vcmp.gt.f32.partialorder %v871, 0.0
  %vm947 = vcmp.gt.f32.partialorder %v876, 0.0
  %vm948 = vcmp.gt.f32.partialorder %v881, 0.0
  %vm949 = vcmp.gt.f32.partialorder %v886, 0.0
  %vm950 = vcmp.gt.f32.partialorder %v891, 0.0
  %vm951 = vcmp.gt.f32.partialorder %v896, 0.0
  %vm952 = vcmp.gt.f32.partialorder %v901, 0.0
  %vm953 = vcmp.gt.f32.partialorder %v906, 0.0
  %vm954 = vcmp.gt.f32.partialorder %v911, 0.0
  %vm955 = vcmp.gt.f32.partialorder %v916, 0.0
  %vm956 = vcmp.gt.f32.partialorder %v921, 0.0
  %vm957 = vcmp.gt.f32.partialorder %v926, 0.0
  %vm958 = vcmp.gt.f32.partialorder %v931, 0.0
  %vm959 = vcmp.gt.f32.partialorder %v936, 0.0
  %vm960 = vcmp.gt.f32.partialorder %v941, 0.0
  %v961 = vmul.f32 %v861, 1.442695
  %v962 = vpow.pop %v961
  %v963 = vmul.f32 %v866, 1.442695
  %v964 = vpow.pop %v963
  %v965 = vmul.f32 %v871, 1.442695
  %v966 = vpow.pop %v965
  %v967 = vmul.f32 %v876, 1.442695
  %v968 = vpow.pop %v967
  %v969 = vmul.f32 %v881, 1.442695
  %v970 = vpow.pop %v969
  %v971 = vmul.f32 %v886, 1.442695
  %v972 = vpow.pop %v971
  %v973 = vmul.f32 %v891, 1.442695
  %v974 = vpow.pop %v973
  %v975 = vmul.f32 %v896, 1.442695
  %v976 = vpow.pop %v975
  %v977 = vmul.f32 %v901, 1.442695
  %v978 = vpow.pop %v977
  %v979 = vmul.f32 %v906, 1.442695
  %v980 = vpow.pop %v979
  %v981 = vmul.f32 %v911, 1.442695
  %v982 = vpow.pop %v981
  %v983 = vmul.f32 %v916, 1.442695
  %v984 = vpow.pop %v983
  %v985 = vmul.f32 %v921, 1.442695
  %v986 = vpow.pop %v985
  %v987 = vmul.f32 %v926, 1.442695
  %v988 = vpow.pop %v987
  %v989 = vmul.f32 %v931, 1.442695
  %v990 = vpow.pop %v989
  %v991 = vmul.f32 %v936, 1.442695
  %v992 = vpow.pop %v991
  %v993 = vmul.f32 %v941, 1.442695
  %v994 = vpow.pop %v993
  %v995 = vsub.f32 %v962, 1.0
  %v996 = vsub.f32 %v964, 1.0
  %v997 = vsub.f32 %v966, 1.0
  %v998 = vsub.f32 %v968, 1.0
  %v999 = vsub.f32 %v970, 1.0
  %v1000 = vsub.f32 %v972, 1.0
  %v1001 = vsub.f32 %v974, 1.0
  %v1002 = vsub.f32 %v976, 1.0
  %v1003 = vsub.f32 %v978, 1.0
  %v1004 = vsub.f32 %v980, 1.0
  %v1005 = vsub.f32 %v982, 1.0
  %v1006 = vsub.f32 %v984, 1.0
  %v1007 = vsub.f32 %v986, 1.0
  %v1008 = vsub.f32 %v988, 1.0
  %v1009 = vsub.f32 %v990, 1.0
  %v1010 = vsub.f32 %v992, 1.0
  %v1011 = vsub.f32 %v994, 1.0
  %v1012 = vsel %vm944, %v861, %v995
  %v1013 = vsel %vm945, %v866, %v996
  %v1014 = vsel %vm946, %v871, %v997
  %v1015 = vsel %vm947, %v876, %v998
  %v1016 = vsel %vm948, %v881, %v999
  %v1017 = vsel %vm949, %v886, %v1000
  %v1018 = vsel %vm950, %v891, %v1001
  %v1019 = vsel %vm951, %v896, %v1002
  %v1020 = vsel %vm952, %v901, %v1003
  %v1021 = vsel %vm953, %v906, %v1004
  %v1022 = vsel %vm954, %v911, %v1005
  %v1023 = vsel %vm955, %v916, %v1006
  %v1024 = vsel %vm956, %v921, %v1007
  %v1025 = vsel %vm957, %v926, %v1008
  %v1026 = vsel %vm958, %v931, %v1009
  %v1027 = vsel %vm959, %v936, %v1010
  %v1028 = vsel %vm960, %v941, %v1011
  %v1029 = vadd.f32 %v1012, 1.0
  %v1030 = vadd.f32 %v1013, 1.0
  %v1031 = vadd.f32 %v1014, 1.0
  %v1032 = vadd.f32 %v1015, 1.0
  %v1033 = vadd.f32 %v1016, 1.0
  %v1034 = vadd.f32 %v1017, 1.0
  %v1035 = vadd.f32 %v1018, 1.0
  %v1036 = vadd.f32 %v1019, 1.0
  %v1037 = vadd.f32 %v1020, 1.0
  %v1038 = vadd.f32 %v1021, 1.0
  %v1039 = vadd.f32 %v1022, 1.0
  %v1040 = vadd.f32 %v1023, 1.0
  %v1041 = vadd.f32 %v1024, 1.0
  %v1042 = vadd.f32 %v1025, 1.0
  %v1043 = vadd.f32 %v1026, 1.0
  %v1044 = vadd.f32 %v1027, 1.0
  %v1045 = vadd.f32 %v1028, 1.0
  %1047 = vset.pattern.permute.xlu0 0
  %1048 = vperm.xlu0 %1047, %v28
  %v1049 = vpop.permute.xlu0 %1048
  %1052 = vset.pattern.permute.xlu0 0
  %1053 = vperm.xlu0 %1052, %v29
  %v1054 = vpop.permute.xlu0 %1053
  %1057 = vset.pattern.permute.xlu0 0
  %1058 = vperm.xlu0 %1057, %v30
  %v1059 = vpop.permute.xlu0 %1058
  %1062 = vset.pattern.permute.xlu0 0
  %1063 = vperm.xlu0 %1062, %v31
  %v1064 = vpop.permute.xlu0 %1063
  %1067 = vset.pattern.permute.xlu0 0
  %1068 = vperm.xlu0 %1067, %v32
  %v1069 = vpop.permute.xlu0 %1068
  %1072 = vset.pattern.permute.xlu0 0
  %1073 = vperm.xlu0 %1072, %v33
  %v1074 = vpop.permute.xlu0 %1073
  %1077 = vset.pattern.permute.xlu0 0
  %1078 = vperm.xlu0 %1077, %v34
  %v1079 = vpop.permute.xlu0 %1078
  %1082 = vset.pattern.permute.xlu0 0
  %1083 = vperm.xlu0 %1082, %v35
  %v1084 = vpop.permute.xlu0 %1083
  %1087 = vset.pattern.permute.xlu0 0
  %1088 = vperm.xlu0 %1087, %v36
  %v1089 = vpop.permute.xlu0 %1088
  %1092 = vset.pattern.permute.xlu0 0
  %1093 = vperm.xlu0 %1092, %v37
  %v1094 = vpop.permute.xlu0 %1093
  %1097 = vset.pattern.permute.xlu0 0
  %1098 = vperm.xlu0 %1097, %v38
  %v1099 = vpop.permute.xlu0 %1098
  %1102 = vset.pattern.permute.xlu0 0
  %1103 = vperm.xlu0 %1102, %v39
  %v1104 = vpop.permute.xlu0 %1103
  %1107 = vset.pattern.permute.xlu0 0
  %1108 = vperm.xlu0 %1107, %v40
  %v1109 = vpop.permute.xlu0 %1108
  %1112 = vset.pattern.permute.xlu0 0
  %1113 = vperm.xlu0 %1112, %v41
  %v1114 = vpop.permute.xlu0 %1113
  %1117 = vset.pattern.permute.xlu0 0
  %1118 = vperm.xlu0 %1117, %v42
  %v1119 = vpop.permute.xlu0 %1118
  %1122 = vset.pattern.permute.xlu0 0
  %1123 = vperm.xlu0 %1122, %v43
  %v1124 = vpop.permute.xlu0 %1123
  %1127 = vset.pattern.permute.xlu0 0
  %1128 = vperm.xlu0 %1127, %v44
  %v1129 = vpop.permute.xlu0 %1128
  %v1131 = vmul.f32 %v1029, %v1049
  %v1132 = vmul.f32 %v1030, %v1054
  %v1133 = vmul.f32 %v1031, %v1059
  %v1134 = vmul.f32 %v1032, %v1064
  %v1135 = vmul.f32 %v1033, %v1069
  %v1136 = vmul.f32 %v1034, %v1074
  %v1137 = vmul.f32 %v1035, %v1079
  %v1138 = vmul.f32 %v1036, %v1084
  %v1139 = vmul.f32 %v1037, %v1089
  %v1140 = vmul.f32 %v1038, %v1094
  %v1141 = vmul.f32 %v1039, %v1099
  %v1142 = vmul.f32 %v1040, %v1104
  %v1143 = vmul.f32 %v1041, %v1109
  %v1144 = vmul.f32 %v1042, %v1114
  %v1145 = vmul.f32 %v1043, %v1119
  %v1146 = vmul.f32 %v1044, %v1124
  %v1147 = vmul.f32 %v1045, %v1129
  %v1148 = vsel %vm63, %v1131, 0.0
  %v1149 = vsel %vm63, %v1132, 0.0
  %v1150 = vadd.f32 %v1148, %v1149
  %v1151 = vsel %vm63, %v1133, 0.0
  %v1152 = vadd.f32 %v1150, %v1151
  %v1153 = vsel %vm63, %v1134, 0.0
  %v1154 = vadd.f32 %v1152, %v1153
  %v1155 = vsel %vm63, %v1135, 0.0
  %v1156 = vadd.f32 %v1154, %v1155
  %v1157 = vsel %vm63, %v1136, 0.0
  %v1158 = vadd.f32 %v1156, %v1157
  %v1159 = vsel %vm63, %v1137, 0.0
  %v1160 = vadd.f32 %v1158, %v1159
  %v1161 = vsel %vm63, %v1138, 0.0
  %v1162 = vadd.f32 %v1160, %v1161
  %v1163 = vsel %vm63, %v1139, 0.0
  %v1164 = vadd.f32 %v1162, %v1163
  %v1165 = vsel %vm63, %v1140, 0.0
  %v1166 = vadd.f32 %v1164, %v1165
  %v1167 = vsel %vm63, %v1141, 0.0
  %v1168 = vadd.f32 %v1166, %v1167
  %v1169 = vsel %vm63, %v1142, 0.0
  %v1170 = vadd.f32 %v1168, %v1169
  %v1171 = vsel %vm63, %v1143, 0.0
  %v1172 = vadd.f32 %v1170, %v1171
  %v1173 = vsel %vm63, %v1144, 0.0
  %v1174 = vadd.f32 %v1172, %v1173
  %v1175 = vsel %vm63, %v1145, 0.0
  %v1176 = vadd.f32 %v1174, %v1175
  %v1177 = vsel %vm63, %v1146, 0.0
  %v1178 = vadd.f32 %v1176, %v1177
  %v1179 = vsel %vm63, %v1147, 0.0
  %v1180 = vadd.f32 %v1178, %v1179
  %v1181 = vmul.f32 %v1180, %v47
  %v1182 = vadd.f32 %v1181, %v319
  %v1183 = vlaneseq
  %v1184 = vand.u32 %v1183, 127
  %vm1185 = vcmp.eq.s32.totalorder %v1184, 3
  %1187 = vset.pattern.permute.xlu0 0
  %1188 = vperm.xlu0 %1187, %v1182
  %v1189 = vpop.permute.xlu0 %1188
  %v1191 = vsel %vm1185, %v1189, 0.0
  %v1192 = vadd.f32 %v1191, 0.0
  %vm1193 = vcmp.eq.s32.totalorder %v1184, 2
  %1194 = vset.pattern.permute.xlu0 1
  %1195 = vperm.xlu0 %1194, %v1182
  %v1196 = vpop.permute.xlu0 %1195
  %v1198 = vsel %vm1193, %v1196, 0.0
  %v1199 = vadd.f32 %v1192, %v1198
  %vm1200 = vcmp.eq.s32.totalorder %v1184, 1
  %1201 = vset.pattern.permute.xlu0 2
  %1202 = vperm.xlu0 %1201, %v1182
  %v1203 = vpop.permute.xlu0 %1202
  %v1205 = vsel %vm1200, %v1203, 0.0
  %v1206 = vadd.f32 %v1199, %v1205
  %vm1207 = vcmp.eq.s32.totalorder %v1184, 0
  %1208 = vset.pattern.permute.xlu0 3
  %1209 = vperm.xlu0 %1208, %v1182
  %v1210 = vpop.permute.xlu0 %1209
  %v1212 = vsel %vm1207, %v1210, 0.0
  %v1213 = vadd.f32 %v1206, %v1212
  %v1214 = vld [vmem:[%s1 + $0x5d0] ss:$0 sm:$0xff]
  %v1215 = vmul.f32 %v1213, %v1214
  %v1216 = vld [vmem:[%s1 + $0x2f0] sm:$0xf]
  %v1217 = vld [vmem:[%s1 + $0x2f8] sm:$0xf]
  %s1218 = scalar_lea.vmem %s1, 768
  %v1219 = vld [vmem:[%s1218] ss:$8 sm:$0x3]
  %v1221 = vlaneseq
  %v1222 = vshrl.u32 %v1221, 7
  %v1223 = vsub.s32 0, %v1222
  %v1224 = vrot.slane %v1219, %v1223
  %v1225 = vlaneseq
  %v1226 = vshrl.u32 %v1225, 7
  %v1227 = vsub.s32 1, %v1226
  %v1228 = vrot.slane %v1219, %v1227
  %v1231 = vsel %vm63, %v1182, 0
  %v1234 = vsel %vm67, %v1216, 0
  %v1237 = vsel %vm67, %v1217, 0
  %1239 = vmatprep.subr.mxu0 %v1237
  %1240 = vmatpush1.msra.mxu0 %v1234
  %1241 = vmatprep.subr.mxu0 0.0
  %1242 = vmatpush1.msra.mxu0 0.0
  %1243 = vmatprep.subr.mxu0 0.0
  %1244 = vmatpush1.msra.mxu0 0.0
  %1245 = vmatprep.subr.mxu0 0.0
  %1246 = vmatpush1.msra.mxu0 0.0
  %1247 = vmatprep.subr.mxu0 0.0
  %1248 = vmatpush1.msra.mxu0 0.0
  %1249 = vmatprep.subr.mxu0 0.0
  %1250 = vmatpush1.msra.mxu0 0.0
  %1251 = vmatprep.subr.mxu0 0.0
  %1252 = vmatpush1.msra.mxu0 0.0
  %1253 = vmatprep.subr.mxu0 0.0
  %1254 = vmatpush1.msra.mxu0 0.0
  %1255 = vmatprep.subr.mxu0 0.0
  %1256 = vmatpush1.msra.mxu0 0.0
  %1257 = vmatprep.subr.mxu0 0.0
  %1258 = vmatpush1.msra.mxu0 0.0
  %1259 = vmatprep.subr.mxu0 0.0
  %1260 = vmatpush1.msra.mxu0 0.0
  %1261 = vmatprep.subr.mxu0 0.0
  %1262 = vmatpush1.msra.mxu0 0.0
  %1263 = vmatprep.subr.mxu0 0.0
  %1264 = vmatpush1.msra.mxu0 0.0
  %1265 = vmatprep.subr.mxu0 0.0
  %1266 = vmatpush1.msra.mxu0 0.0
  %1267 = vmatprep.subr.mxu0 0.0
  %1268 = vmatpush1.msra.mxu0 0.0
  %1269 = vmatprep.subr.mxu0 0.0
  %1270 = vmatpush1.msra.mxu0 0.0
  %1271 = vmatprep.subr.mxu0 0.0
  %1272 = vmatpush1.msra.mxu0 0.0
  %1273 = vmatprep.subr.mxu0 0.0
  %1274 = vmatpush1.msra.mxu0 0.0
  %1275 = vmatprep.subr.mxu0 0.0
  %1276 = vmatpush1.msra.mxu0 0.0
  %1277 = vmatprep.subr.mxu0 0.0
  %1278 = vmatpush1.msra.mxu0 0.0
  %1279 = vmatprep.subr.mxu0 0.0
  %1280 = vmatpush1.msra.mxu0 0.0
  %1281 = vmatprep.subr.mxu0 0.0
  %1282 = vmatpush1.msra.mxu0 0.0
  %1283 = vmatprep.subr.mxu0 0.0
  %1284 = vmatpush1.msra.mxu0 0.0
  %1285 = vmatprep.subr.mxu0 0.0
  %1286 = vmatpush1.msra.mxu0 0.0
  %1287 = vmatprep.subr.mxu0 0.0
  %1288 = vmatpush1.msra.mxu0 0.0
  %1289 = vmatprep.subr.mxu0 0.0
  %1290 = vmatpush1.msra.mxu0 0.0
  %1291 = vmatprep.subr.mxu0 0.0
  %1292 = vmatpush1.msra.mxu0 0.0
  %1293 = vmatprep.subr.mxu0 0.0
  %1294 = vmatpush1.msra.mxu0 0.0
  %1295 = vmatprep.subr.mxu0 0.0
  %1296 = vmatpush1.msra.mxu0 0.0
  %1297 = vmatprep.subr.mxu0 0.0
  %1298 = vmatpush1.msra.mxu0 0.0
  %1299 = vmatprep.subr.mxu0 0.0
  %1300 = vmatpush1.msra.mxu0 0.0
  %1301 = vmatprep.subr.mxu0 0.0
  %1302 = vmatpush1.msra.mxu0 0.0
  %1303 = vmatprep.mubr.f32.mxu0 0.0
  %1304 = vmatmul.mubr.f32.gmra.mrb[0].mxu0 %v1231
  %v1305 = vpop.f32.mrb[0].mxu0
  %v1306 = vadd.f32 %v1224, %v1305
  %v1307 = vpop.f32.mrb[0].mxu0
  %v1308 = vadd.f32 %v1228, %v1307
  %1309 = vdwg.mxu0
  %v1310 = vmax.f32 %v1308, 0.0
  %v1311 = vld [vmem:[%s1 + $0x310] sm:$0xff]
  %v1312 = vld [vmem:[%s1 + $0x320] sm:$0xff]
  %v1313 = vld [vmem:[%s1 + $0x330] sm:$0xff]
  %v1314 = vld [vmem:[%s1 + $0x340] sm:$0xff]
  %v1315 = vld [vmem:[%s1 + $0x350] ss:$0 sm:$0xff]
  %v1317 = vsel %vm151, %v1310, 0
  %1319 = vmatprep.subr.mxu0 0.0
  %1320 = vmatpush1.msra.mxu0 %v1311
  %1321 = vmatprep.subr.mxu0 0.0
  %1322 = vmatpush1.msra.mxu0 %v1312
  %1323 = vmatprep.subr.mxu0 0.0
  %1324 = vmatpush1.msra.mxu0 %v1313
  %1325 = vmatprep.subr.mxu0 0.0
  %1326 = vmatpush1.msra.mxu0 %v1314
  %1327 = vmatprep.subr.mxu0 0.0
  %1328 = vmatpush1.msra.mxu0 0.0
  %1329 = vmatprep.subr.mxu0 0.0
  %1330 = vmatpush1.msra.mxu0 0.0
  %1331 = vmatprep.subr.mxu0 0.0
  %1332 = vmatpush1.msra.mxu0 0.0
  %1333 = vmatprep.subr.mxu0 0.0
  %1334 = vmatpush1.msra.mxu0 0.0
  %1335 = vmatprep.subr.mxu0 0.0
  %1336 = vmatpush1.msra.mxu0 0.0
  %1337 = vmatprep.subr.mxu0 0.0
  %1338 = vmatpush1.msra.mxu0 0.0
  %1339 = vmatprep.subr.mxu0 0.0
  %1340 = vmatpush1.msra.mxu0 0.0
  %1341 = vmatprep.subr.mxu0 0.0
  %1342 = vmatpush1.msra.mxu0 0.0
  %1343 = vmatprep.subr.mxu0 0.0
  %1344 = vmatpush1.msra.mxu0 0.0
  %1345 = vmatprep.subr.mxu0 0.0
  %1346 = vmatpush1.msra.mxu0 0.0
  %1347 = vmatprep.subr.mxu0 0.0
  %1348 = vmatpush1.msra.mxu0 0.0
  %1349 = vmatprep.subr.mxu0 0.0
  %1350 = vmatpush1.msra.mxu0 0.0
  %1351 = vmatprep.subr.mxu0 0.0
  %1352 = vmatpush1.msra.mxu0 0.0
  %1353 = vmatprep.subr.mxu0 0.0
  %1354 = vmatpush1.msra.mxu0 0.0
  %1355 = vmatprep.subr.mxu0 0.0
  %1356 = vmatpush1.msra.mxu0 0.0
  %1357 = vmatprep.subr.mxu0 0.0
  %1358 = vmatpush1.msra.mxu0 0.0
  %1359 = vmatprep.subr.mxu0 0.0
  %1360 = vmatpush1.msra.mxu0 0.0
  %1361 = vmatprep.subr.mxu0 0.0
  %1362 = vmatpush1.msra.mxu0 0.0
  %1363 = vmatprep.subr.mxu0 0.0
  %1364 = vmatpush1.msra.mxu0 0.0
  %1365 = vmatprep.subr.mxu0 0.0
  %1366 = vmatpush1.msra.mxu0 0.0
  %1367 = vmatprep.subr.mxu0 0.0
  %1368 = vmatpush1.msra.mxu0 0.0
  %1369 = vmatprep.subr.mxu0 0.0
  %1370 = vmatpush1.msra.mxu0 0.0
  %1371 = vmatprep.subr.mxu0 0.0
  %1372 = vmatpush1.msra.mxu0 0.0
  %1373 = vmatprep.subr.mxu0 0.0
  %1374 = vmatpush1.msra.mxu0 0.0
  %1375 = vmatprep.subr.mxu0 0.0
  %1376 = vmatpush1.msra.mxu0 0.0
  %1377 = vmatprep.subr.mxu0 0.0
  %1378 = vmatpush1.msra.mxu0 0.0
  %1379 = vmatprep.subr.mxu0 0.0
  %1380 = vmatpush1.msra.mxu0 0.0
  %1381 = vmatprep.subr.mxu0 0.0
  %1382 = vmatpush1.msra.mxu0 0.0
  %1383 = vmatprep.mubr.f32.mxu0 0.0
  %1384 = vmatmul.mubr.f32.gmra.mrb[0].mxu0 %v1317
  %v1385 = vpop.f32.mrb[0].mxu0
  %v1386 = vadd.f32 %v1315, %v1385
  %v1387 = vpop.f32.mrb[0].mxu0
  %1388 = vdwg.mxu0
  %v1389 = vmax.f32 %v1386, 0.0
  %v1390 = vld [vmem:[%s1 + $0x360] sm:$0xff]
  %v1391 = vld [vmem:[%s1 + $0x368] sm:$0xff]
  %v1392 = vld [vmem:[%s1 + $0x370] sm:$0xff]
  %v1393 = vld [vmem:[%s1 + $0x378] sm:$0xff]
  %v1394 = vld [vmem:[%s1 + $0x380] sm:$0xff]
  %v1395 = vld [vmem:[%s1 + $0x388] sm:$0xff]
  %v1396 = vld [vmem:[%s1 + $0x390] sm:$0xff]
  %v1397 = vld [vmem:[%s1 + $0x398] sm:$0xff]
  %s1398 = scalar_lea.vmem %s1, 928
  %v1399 = vld [vmem:[%s1398] ss:$8 sm:$0x3]
  %v1401 = vlaneseq
  %v1402 = vshrl.u32 %v1401, 7
  %v1403 = vsub.s32 0, %v1402
  %v1404 = vrot.slane %v1399, %v1403
  %v1405 = vlaneseq
  %v1406 = vshrl.u32 %v1405, 7
  %v1407 = vsub.s32 1, %v1406
  %v1408 = vrot.slane %v1399, %v1407
  %v1412 = vsel %vm151, %v1389, 0
  %1414 = vmatprep.subr.mxu0 %v1391
  %1415 = vmatpush1.msra.mxu0 %v1390
  %1416 = vmatprep.subr.mxu0 %v1393
  %1417 = vmatpush1.msra.mxu0 %v1392
  %1418 = vmatprep.subr.mxu0 %v1395
  %1419 = vmatpush1.msra.mxu0 %v1394
  %1420 = vmatprep.subr.mxu0 %v1397
  %1421 = vmatpush1.msra.mxu0 %v1396
  %1422 = vmatprep.subr.mxu0 0.0
  %1423 = vmatpush1.msra.mxu0 0.0
  %1424 = vmatprep.subr.mxu0 0.0
  %1425 = vmatpush1.msra.mxu0 0.0
  %1426 = vmatprep.subr.mxu0 0.0
  %1427 = vmatpush1.msra.mxu0 0.0
  %1428 = vmatprep.subr.mxu0 0.0
  %1429 = vmatpush1.msra.mxu0 0.0
  %1430 = vmatprep.subr.mxu0 0.0
  %1431 = vmatpush1.msra.mxu0 0.0
  %1432 = vmatprep.subr.mxu0 0.0
  %1433 = vmatpush1.msra.mxu0 0.0
  %1434 = vmatprep.subr.mxu0 0.0
  %1435 = vmatpush1.msra.mxu0 0.0
  %1436 = vmatprep.subr.mxu0 0.0
  %1437 = vmatpush1.msra.mxu0 0.0
  %1438 = vmatprep.subr.mxu0 0.0
  %1439 = vmatpush1.msra.mxu0 0.0
  %1440 = vmatprep.subr.mxu0 0.0
  %1441 = vmatpush1.msra.mxu0 0.0
  %1442 = vmatprep.subr.mxu0 0.0
  %1443 = vmatpush1.msra.mxu0 0.0
  %1444 = vmatprep.subr.mxu0 0.0
  %1445 = vmatpush1.msra.mxu0 0.0
  %1446 = vmatprep.subr.mxu0 0.0
  %1447 = vmatpush1.msra.mxu0 0.0
  %1448 = vmatprep.subr.mxu0 0.0
  %1449 = vmatpush1.msra.mxu0 0.0
  %1450 = vmatprep.subr.mxu0 0.0
  %1451 = vmatpush1.msra.mxu0 0.0
  %1452 = vmatprep.subr.mxu0 0.0
  %1453 = vmatpush1.msra.mxu0 0.0
  %1454 = vmatprep.subr.mxu0 0.0
  %1455 = vmatpush1.msra.mxu0 0.0
  %1456 = vmatprep.subr.mxu0 0.0
  %1457 = vmatpush1.msra.mxu0 0.0
  %1458 = vmatprep.subr.mxu0 0.0
  %1459 = vmatpush1.msra.mxu0 0.0
  %1460 = vmatprep.subr.mxu0 0.0
  %1461 = vmatpush1.msra.mxu0 0.0
  %1462 = vmatprep.subr.mxu0 0.0
  %1463 = vmatpush1.msra.mxu0 0.0
  %1464 = vmatprep.subr.mxu0 0.0
  %1465 = vmatpush1.msra.mxu0 0.0
  %1466 = vmatprep.subr.mxu0 0.0
  %1467 = vmatpush1.msra.mxu0 0.0
  %1468 = vmatprep.subr.mxu0 0.0
  %1469 = vmatpush1.msra.mxu0 0.0
  %1470 = vmatprep.subr.mxu0 0.0
  %1471 = vmatpush1.msra.mxu0 0.0
  %1472 = vmatprep.subr.mxu0 0.0
  %1473 = vmatpush1.msra.mxu0 0.0
  %1474 = vmatprep.subr.mxu0 0.0
  %1475 = vmatpush1.msra.mxu0 0.0
  %1476 = vmatprep.subr.mxu0 0.0
  %1477 = vmatpush1.msra.mxu0 0.0
  %1478 = vmatprep.mubr.f32.mxu0 0.0
  %1479 = vmatmul.mubr.f32.gmra.mrb[0].mxu0 %v1412
  %v1480 = vpop.f32.mrb[0].mxu0
  %v1481 = vadd.f32 %v1404, %v1480
  %v1482 = vpop.f32.mrb[0].mxu0
  %v1483 = vadd.f32 %v1408, %v1482
  %1484 = vdwg.mxu0
  %v1485 = vmul.f32 %v324, %v1306
  %v1486 = vmul.f32 %v329, %v1306
  %v1487 = vmul.f32 %v334, %v1306
  %v1488 = vmul.f32 %v339, %v1306
  %v1489 = vmul.f32 %v344, %v1306
  %v1490 = vmul.f32 %v349, %v1306
  %v1491 = vmul.f32 %v354, %v1306
  %v1492 = vmul.f32 %v359, %v1306
  %v1493 = vmul.f32 %v364, %v1306
  %v1494 = vmul.f32 %v369, %v1306
  %v1495 = vmul.f32 %v374, %v1306
  %v1496 = vmul.f32 %v379, %v1306
  %v1497 = vmul.f32 %v384, %v1306
  %v1498 = vmul.f32 %v389, %v1306
  %v1499 = vmul.f32 %v394, %v1306
  %v1500 = vmul.f32 %v399, %v1306
  %v1501 = vmul.f32 %v404, %v1306
  %v1502 = vadd.f32 %v1481, %v1485
  %v1503 = vadd.f32 %v1481, %v1486
  %v1504 = vadd.f32 %v1481, %v1487
  %v1505 = vadd.f32 %v1481, %v1488
  %v1506 = vadd.f32 %v1481, %v1489
  %v1507 = vadd.f32 %v1481, %v1490
  %v1508 = vadd.f32 %v1481, %v1491
  %v1509 = vadd.f32 %v1481, %v1492
  %v1510 = vadd.f32 %v1481, %v1493
  %v1511 = vadd.f32 %v1481, %v1494
  %v1512 = vadd.f32 %v1481, %v1495
  %v1513 = vadd.f32 %v1481, %v1496
  %v1514 = vadd.f32 %v1481, %v1497
  %v1515 = vadd.f32 %v1481, %v1498
  %v1516 = vadd.f32 %v1481, %v1499
  %v1517 = vadd.f32 %v1481, %v1500
  %v1518 = vadd.f32 %v1481, %v1501
  %vm1519 = vcmp.gt.f32.partialorder %v1502, 0.0
  %vm1520 = vcmp.gt.f32.partialorder %v1503, 0.0
  %vm1521 = vcmp.gt.f32.partialorder %v1504, 0.0
  %vm1522 = vcmp.gt.f32.partialorder %v1505, 0.0
  %vm1523 = vcmp.gt.f32.partialorder %v1506, 0.0
  %vm1524 = vcmp.gt.f32.partialorder %v1507, 0.0
  %vm1525 = vcmp.gt.f32.partialorder %v1508, 0.0
  %vm1526 = vcmp.gt.f32.partialorder %v1509, 0.0
  %vm1527 = vcmp.gt.f32.partialorder %v1510, 0.0
  %vm1528 = vcmp.gt.f32.partialorder %v1511, 0.0
  %vm1529 = vcmp.gt.f32.partialorder %v1512, 0.0
  %vm1530 = vcmp.gt.f32.partialorder %v1513, 0.0
  %vm1531 = vcmp.gt.f32.partialorder %v1514, 0.0
  %vm1532 = vcmp.gt.f32.partialorder %v1515, 0.0
  %vm1533 = vcmp.gt.f32.partialorder %v1516, 0.0
  %vm1534 = vcmp.gt.f32.partialorder %v1517, 0.0
  %vm1535 = vcmp.gt.f32.partialorder %v1518, 0.0
  %v1536 = vmul.f32 %v1502, 1.442695
  %v1537 = vpow.pop %v1536
  %v1538 = vmul.f32 %v1503, 1.442695
  %v1539 = vpow.pop %v1538
  %v1540 = vmul.f32 %v1504, 1.442695
  %v1541 = vpow.pop %v1540
  %v1542 = vmul.f32 %v1505, 1.442695
  %v1543 = vpow.pop %v1542
  %v1544 = vmul.f32 %v1506, 1.442695
  %v1545 = vpow.pop %v1544
  %v1546 = vmul.f32 %v1507, 1.442695
  %v1547 = vpow.pop %v1546
  %v1548 = vmul.f32 %v1508, 1.442695
  %v1549 = vpow.pop %v1548
  %v1550 = vmul.f32 %v1509, 1.442695
  %v1551 = vpow.pop %v1550
  %v1552 = vmul.f32 %v1510, 1.442695
  %v1553 = vpow.pop %v1552
  %v1554 = vmul.f32 %v1511, 1.442695
  %v1555 = vpow.pop %v1554
  %v1556 = vmul.f32 %v1512, 1.442695
  %v1557 = vpow.pop %v1556
  %v1558 = vmul.f32 %v1513, 1.442695
  %v1559 = vpow.pop %v1558
  %v1560 = vmul.f32 %v1514, 1.442695
  %v1561 = vpow.pop %v1560
  %v1562 = vmul.f32 %v1515, 1.442695
  %v1563 = vpow.pop %v1562
  %v1564 = vmul.f32 %v1516, 1.442695
  %v1565 = vpow.pop %v1564
  %v1566 = vmul.f32 %v1517, 1.442695
  %v1567 = vpow.pop %v1566
  %v1568 = vmul.f32 %v1518, 1.442695
  %v1569 = vpow.pop %v1568
  %v1570 = vsub.f32 %v1537, 1.0
  %v1571 = vsub.f32 %v1539, 1.0
  %v1572 = vsub.f32 %v1541, 1.0
  %v1573 = vsub.f32 %v1543, 1.0
  %v1574 = vsub.f32 %v1545, 1.0
  %v1575 = vsub.f32 %v1547, 1.0
  %v1576 = vsub.f32 %v1549, 1.0
  %v1577 = vsub.f32 %v1551, 1.0
  %v1578 = vsub.f32 %v1553, 1.0
  %v1579 = vsub.f32 %v1555, 1.0
  %v1580 = vsub.f32 %v1557, 1.0
  %v1581 = vsub.f32 %v1559, 1.0
  %v1582 = vsub.f32 %v1561, 1.0
  %v1583 = vsub.f32 %v1563, 1.0
  %v1584 = vsub.f32 %v1565, 1.0
  %v1585 = vsub.f32 %v1567, 1.0
  %v1586 = vsub.f32 %v1569, 1.0
  %v1587 = vsel %vm1519, %v1502, %v1570
  %v1588 = vsel %vm1520, %v1503, %v1571
  %v1589 = vsel %vm1521, %v1504, %v1572
  %v1590 = vsel %vm1522, %v1505, %v1573
  %v1591 = vsel %vm1523, %v1506, %v1574
  %v1592 = vsel %vm1524, %v1507, %v1575
  %v1593 = vsel %vm1525, %v1508, %v1576
  %v1594 = vsel %vm1526, %v1509, %v1577
  %v1595 = vsel %vm1527, %v1510, %v1578
  %v1596 = vsel %vm1528, %v1511, %v1579
  %v1597 = vsel %vm1529, %v1512, %v1580
  %v1598 = vsel %vm1530, %v1513, %v1581
  %v1599 = vsel %vm1531, %v1514, %v1582
  %v1600 = vsel %vm1532, %v1515, %v1583
  %v1601 = vsel %vm1533, %v1516, %v1584
  %v1602 = vsel %vm1534, %v1517, %v1585
  %v1603 = vsel %vm1535, %v1518, %v1586
  %v1604 = vld [vmem:[%s1 + $0x3b0] sm:$0xff]
  %v1605 = vld [vmem:[%s1 + $0x3c0] sm:$0xff]
  %v1606 = vld [vmem:[%s1 + $0x3d0] sm:$0xff]
  %v1607 = vld [vmem:[%s1 + $0x3e0] sm:$0xff]
  %v1608 = vld [vmem:[%s1 + $0x3f0] sm:$0xff]
  %v1609 = vld [vmem:[%s1 + $0x400] sm:$0xff]
  %v1610 = vld [vmem:[%s1 + $0x410] sm:$0xff]
  %v1611 = vld [vmem:[%s1 + $0x420] sm:$0xff]
  %v1612 = vld [vmem:[%s1 + $0x430] sm:$0xff]
  %v1613 = vld [vmem:[%s1 + $0x440] sm:$0xff]
  %v1614 = vld [vmem:[%s1 + $0x450] sm:$0xff]
  %v1615 = vld [vmem:[%s1 + $0x460] sm:$0xff]
  %v1616 = vld [vmem:[%s1 + $0x470] sm:$0xff]
  %v1617 = vld [vmem:[%s1 + $0x480] sm:$0xff]
  %v1618 = vld [vmem:[%s1 + $0x490] sm:$0xff]
  %v1619 = vld [vmem:[%s1 + $0x4a0] sm:$0xff]
  %v1620 = vld [vmem:[%s1 + $0x4b0] ss:$0 sm:$0xff]
  %1621 = vmatprep.subr.mxu0 0.0
  %1622 = vmatpush1.msra.mxu0 %v1604
  %1623 = vmatprep.subr.mxu0 0.0
  %1624 = vmatpush1.msra.mxu0 %v1605
  %1625 = vmatprep.subr.mxu0 0.0
  %1626 = vmatpush1.msra.mxu0 %v1606
  %1627 = vmatprep.subr.mxu0 0.0
  %1628 = vmatpush1.msra.mxu0 %v1607
  %1629 = vmatprep.subr.mxu0 0.0
  %1630 = vmatpush1.msra.mxu0 %v1608
  %1631 = vmatprep.subr.mxu0 0.0
  %1632 = vmatpush1.msra.mxu0 %v1609
  %1633 = vmatprep.subr.mxu0 0.0
  %1634 = vmatpush1.msra.mxu0 %v1610
  %1635 = vmatprep.subr.mxu0 0.0
  %1636 = vmatpush1.msra.mxu0 %v1611
  %1637 = vmatprep.subr.mxu0 0.0
  %1638 = vmatpush1.msra.mxu0 %v1612
  %1639 = vmatprep.subr.mxu0 0.0
  %1640 = vmatpush1.msra.mxu0 %v1613
  %1641 = vmatprep.subr.mxu0 0.0
  %1642 = vmatpush1.msra.mxu0 %v1614
  %1643 = vmatprep.subr.mxu0 0.0
  %1644 = vmatpush1.msra.mxu0 %v1615
  %1645 = vmatprep.subr.mxu0 0.0
  %1646 = vmatpush1.msra.mxu0 %v1616
  %1647 = vmatprep.subr.mxu0 0.0
  %1648 = vmatpush1.msra.mxu0 %v1617
  %1649 = vmatprep.subr.mxu0 0.0
  %1650 = vmatpush1.msra.mxu0 %v1618
  %1651 = vmatprep.subr.mxu0 0.0
  %1652 = vmatpush1.msra.mxu0 %v1619
  %1653 = vmatprep.subr.mxu0 0.0
  %1654 = vmatpush1.msra.mxu0 0.0
  %1655 = vmatprep.subr.mxu0 0.0
  %1656 = vmatpush1.msra.mxu0 0.0
  %1657 = vmatprep.subr.mxu0 0.0
  %1658 = vmatpush1.msra.mxu0 0.0
  %1659 = vmatprep.subr.mxu0 0.0
  %1660 = vmatpush1.msra.mxu0 0.0
  %1661 = vmatprep.subr.mxu0 0.0
  %1662 = vmatpush1.msra.mxu0 0.0
  %1663 = vmatprep.subr.mxu0 0.0
  %1664 = vmatpush1.msra.mxu0 0.0
  %1665 = vmatprep.subr.mxu0 0.0
  %1666 = vmatpush1.msra.mxu0 0.0
  %1667 = vmatprep.subr.mxu0 0.0
  %1668 = vmatpush1.msra.mxu0 0.0
  %1669 = vmatprep.subr.mxu0 0.0
  %1670 = vmatpush1.msra.mxu0 0.0
  %1671 = vmatprep.subr.mxu0 0.0
  %1672 = vmatpush1.msra.mxu0 0.0
  %1673 = vmatprep.subr.mxu0 0.0
  %1674 = vmatpush1.msra.mxu0 0.0
  %1675 = vmatprep.subr.mxu0 0.0
  %1676 = vmatpush1.msra.mxu0 0.0
  %1677 = vmatprep.subr.mxu0 0.0
  %1678 = vmatpush1.msra.mxu0 0.0
  %1679 = vmatprep.subr.mxu0 0.0
  %1680 = vmatpush1.msra.mxu0 0.0
  %1681 = vmatprep.subr.mxu0 0.0
  %1682 = vmatpush1.msra.mxu0 0.0
  %1683 = vmatprep.subr.mxu0 0.0
  %1684 = vmatpush1.msra.mxu0 0.0
  %1685 = vmatprep.mubr.f32.mxu0 0.0
  %1686 = vmatmul.mubr.f32.gmra.mrb[0].mxu0 %v1587
  %v1687 = vpop.f32.mrb[0].mxu0
  %v1688 = vadd.f32 %v1620, %v1687
  %v1689 = vpop.f32.mrb[0].mxu0
  %1690 = vmatprep.mubr.f32.mxu0 0.0
  %1691 = vmatmul.mubr.f32.gmra.mrb[0].mxu0 %v1588
  %v1692 = vpop.f32.mrb[0].mxu0
  %v1693 = vadd.f32 %v1620, %v1692
  %v1694 = vpop.f32.mrb[0].mxu0
  %1695 = vmatprep.mubr.f32.mxu0 0.0
  %1696 = vmatmul.mubr.f32.gmra.mrb[0].mxu0 %v1589
  %v1697 = vpop.f32.mrb[0].mxu0
  %v1698 = vadd.f32 %v1620, %v1697
  %v1699 = vpop.f32.mrb[0].mxu0
  %1700 = vmatprep.mubr.f32.mxu0 0.0
  %1701 = vmatmul.mubr.f32.gmra.mrb[0].mxu0 %v1590
  %v1702 = vpop.f32.mrb[0].mxu0
  %v1703 = vadd.f32 %v1620, %v1702
  %v1704 = vpop.f32.mrb[0].mxu0
  %1705 = vmatprep.mubr.f32.mxu0 0.0
  %1706 = vmatmul.mubr.f32.gmra.mrb[0].mxu0 %v1591
  %v1707 = vpop.f32.mrb[0].mxu0
  %v1708 = vadd.f32 %v1620, %v1707
  %v1709 = vpop.f32.mrb[0].mxu0
  %1710 = vmatprep.mubr.f32.mxu0 0.0
  %1711 = vmatmul.mubr.f32.gmra.mrb[0].mxu0 %v1592
  %v1712 = vpop.f32.mrb[0].mxu0
  %v1713 = vadd.f32 %v1620, %v1712
  %v1714 = vpop.f32.mrb[0].mxu0
  %1715 = vmatprep.mubr.f32.mxu0 0.0
  %1716 = vmatmul.mubr.f32.gmra.mrb[0].mxu0 %v1593
  %v1717 = vpop.f32.mrb[0].mxu0
  %v1718 = vadd.f32 %v1620, %v1717
  %v1719 = vpop.f32.mrb[0].mxu0
  %1720 = vmatprep.mubr.f32.mxu0 0.0
  %1721 = vmatmul.mubr.f32.gmra.mrb[0].mxu0 %v1594
  %v1722 = vpop.f32.mrb[0].mxu0
  %v1723 = vadd.f32 %v1620, %v1722
  %v1724 = vpop.f32.mrb[0].mxu0
  %1725 = vmatprep.mubr.f32.mxu0 0.0
  %1726 = vmatmul.mubr.f32.gmra.mrb[0].mxu0 %v1595
  %v1727 = vpop.f32.mrb[0].mxu0
  %v1728 = vadd.f32 %v1620, %v1727
  %v1729 = vpop.f32.mrb[0].mxu0
  %1730 = vmatprep.mubr.f32.mxu0 0.0
  %1731 = vmatmul.mubr.f32.gmra.mrb[0].mxu0 %v1596
  %v1732 = vpop.f32.mrb[0].mxu0
  %v1733 = vadd.f32 %v1620, %v1732
  %v1734 = vpop.f32.mrb[0].mxu0
  %1735 = vmatprep.mubr.f32.mxu0 0.0
  %1736 = vmatmul.mubr.f32.gmra.mrb[0].mxu0 %v1597
  %v1737 = vpop.f32.mrb[0].mxu0
  %v1738 = vadd.f32 %v1620, %v1737
  %v1739 = vpop.f32.mrb[0].mxu0
  %1740 = vmatprep.mubr.f32.mxu0 0.0
  %1741 = vmatmul.mubr.f32.gmra.mrb[0].mxu0 %v1598
  %v1742 = vpop.f32.mrb[0].mxu0
  %v1743 = vadd.f32 %v1620, %v1742
  %v1744 = vpop.f32.mrb[0].mxu0
  %1745 = vmatprep.mubr.f32.mxu0 0.0
  %1746 = vmatmul.mubr.f32.gmra.mrb[0].mxu0 %v1599
  %v1747 = vpop.f32.mrb[0].mxu0
  %v1748 = vadd.f32 %v1620, %v1747
  %v1749 = vpop.f32.mrb[0].mxu0
  %1750 = vmatprep.mubr.f32.mxu0 0.0
  %1751 = vmatmul.mubr.f32.gmra.mrb[0].mxu0 %v1600
  %v1752 = vpop.f32.mrb[0].mxu0
  %v1753 = vadd.f32 %v1620, %v1752
  %v1754 = vpop.f32.mrb[0].mxu0
  %1755 = vmatprep.mubr.f32.mxu0 0.0
  %1756 = vmatmul.mubr.f32.gmra.mrb[0].mxu0 %v1601
  %v1757 = vpop.f32.mrb[0].mxu0
  %v1758 = vadd.f32 %v1620, %v1757
  %v1759 = vpop.f32.mrb[0].mxu0
  %1760 = vmatprep.mubr.f32.mxu0 0.0
  %1761 = vmatmul.mubr.f32.gmra.mrb[0].mxu0 %v1602
  %v1762 = vpop.f32.mrb[0].mxu0
  %v1763 = vadd.f32 %v1620, %v1762
  %v1764 = vpop.f32.mrb[0].mxu0
  %1765 = vmatprep.mubr.f32.mxu0 0.0
  %1766 = vmatmul.mubr.f32.gmra.mrb[0].mxu0 %v1603
  %v1767 = vpop.f32.mrb[0].mxu0
  %v1768 = vadd.f32 %v1620, %v1767
  %v1769 = vpop.f32.mrb[0].mxu0
  %1770 = vdwg.mxu0
  %vm1771 = vcmp.gt.f32.partialorder %v1688, 0.0
  %vm1772 = vcmp.gt.f32.partialorder %v1693, 0.0
  %vm1773 = vcmp.gt.f32.partialorder %v1698, 0.0
  %vm1774 = vcmp.gt.f32.partialorder %v1703, 0.0
  %vm1775 = vcmp.gt.f32.partialorder %v1708, 0.0
  %vm1776 = vcmp.gt.f32.partialorder %v1713, 0.0
  %vm1777 = vcmp.gt.f32.partialorder %v1718, 0.0
  %vm1778 = vcmp.gt.f32.partialorder %v1723, 0.0
  %vm1779 = vcmp.gt.f32.partialorder %v1728, 0.0
  %vm1780 = vcmp.gt.f32.partialorder %v1733, 0.0
  %vm1781 = vcmp.gt.f32.partialorder %v1738, 0.0
  %vm1782 = vcmp.gt.f32.partialorder %v1743, 0.0
  %vm1783 = vcmp.gt.f32.partialorder %v1748, 0.0
  %vm1784 = vcmp.gt.f32.partialorder %v1753, 0.0
  %vm1785 = vcmp.gt.f32.partialorder %v1758, 0.0
  %vm1786 = vcmp.gt.f32.partialorder %v1763, 0.0
  %vm1787 = vcmp.gt.f32.partialorder %v1768, 0.0
  %v1788 = vmul.f32 %v1688, 1.442695
  %v1789 = vpow.pop %v1788
  %v1790 = vmul.f32 %v1693, 1.442695
  %v1791 = vpow.pop %v1790
  %v1792 = vmul.f32 %v1698, 1.442695
  %v1793 = vpow.pop %v1792
  %v1794 = vmul.f32 %v1703, 1.442695
  %v1795 = vpow.pop %v1794
  %v1796 = vmul.f32 %v1708, 1.442695
  %v1797 = vpow.pop %v1796
  %v1798 = vmul.f32 %v1713, 1.442695
  %v1799 = vpow.pop %v1798
  %v1800 = vmul.f32 %v1718, 1.442695
  %v1801 = vpow.pop %v1800
  %v1802 = vmul.f32 %v1723, 1.442695
  %v1803 = vpow.pop %v1802
  %v1804 = vmul.f32 %v1728, 1.442695
  %v1805 = vpow.pop %v1804
  %v1806 = vmul.f32 %v1733, 1.442695
  %v1807 = vpow.pop %v1806
  %v1808 = vmul.f32 %v1738, 1.442695
  %v1809 = vpow.pop %v1808
  %v1810 = vmul.f32 %v1743, 1.442695
  %v1811 = vpow.pop %v1810
  %v1812 = vmul.f32 %v1748, 1.442695
  %v1813 = vpow.pop %v1812
  %v1814 = vmul.f32 %v1753, 1.442695
  %v1815 = vpow.pop %v1814
  %v1816 = vmul.f32 %v1758, 1.442695
  %v1817 = vpow.pop %v1816
  %v1818 = vmul.f32 %v1763, 1.442695
  %v1819 = vpow.pop %v1818
  %v1820 = vmul.f32 %v1768, 1.442695
  %v1821 = vpow.pop %v1820
  %v1822 = vsub.f32 %v1789, 1.0
  %v1823 = vsub.f32 %v1791, 1.0
  %v1824 = vsub.f32 %v1793, 1.0
  %v1825 = vsub.f32 %v1795, 1.0
  %v1826 = vsub.f32 %v1797, 1.0
  %v1827 = vsub.f32 %v1799, 1.0
  %v1828 = vsub.f32 %v1801, 1.0
  %v1829 = vsub.f32 %v1803, 1.0
  %v1830 = vsub.f32 %v1805, 1.0
  %v1831 = vsub.f32 %v1807, 1.0
  %v1832 = vsub.f32 %v1809, 1.0
  %v1833 = vsub.f32 %v1811, 1.0
  %v1834 = vsub.f32 %v1813, 1.0
  %v1835 = vsub.f32 %v1815, 1.0
  %v1836 = vsub.f32 %v1817, 1.0
  %v1837 = vsub.f32 %v1819, 1.0
  %v1838 = vsub.f32 %v1821, 1.0
  %v1839 = vsel %vm1771, %v1688, %v1822
  %v1840 = vsel %vm1772, %v1693, %v1823
  %v1841 = vsel %vm1773, %v1698, %v1824
  %v1842 = vsel %vm1774, %v1703, %v1825
  %v1843 = vsel %vm1775, %v1708, %v1826
  %v1844 = vsel %vm1776, %v1713, %v1827
  %v1845 = vsel %vm1777, %v1718, %v1828
  %v1846 = vsel %vm1778, %v1723, %v1829
  %v1847 = vsel %vm1779, %v1728, %v1830
  %v1848 = vsel %vm1780, %v1733, %v1831
  %v1849 = vsel %vm1781, %v1738, %v1832
  %v1850 = vsel %vm1782, %v1743, %v1833
  %v1851 = vsel %vm1783, %v1748, %v1834
  %v1852 = vsel %vm1784, %v1753, %v1835
  %v1853 = vsel %vm1785, %v1758, %v1836
  %v1854 = vsel %vm1786, %v1763, %v1837
  %v1855 = vsel %vm1787, %v1768, %v1838
  %v1856 = vld [vmem:[%s1 + $0x4c0] sm:$0xff]
  %v1857 = vld [vmem:[%s1 + $0x4d0] sm:$0xff]
  %v1858 = vld [vmem:[%s1 + $0x4e0] sm:$0xff]
  %v1859 = vld [vmem:[%s1 + $0x4f0] sm:$0xff]
  %v1860 = vld [vmem:[%s1 + $0x500] sm:$0xff]
  %v1861 = vld [vmem:[%s1 + $0x510] sm:$0xff]
  %v1862 = vld [vmem:[%s1 + $0x520] sm:$0xff]
  %v1863 = vld [vmem:[%s1 + $0x530] sm:$0xff]
  %v1864 = vld [vmem:[%s1 + $0x540] sm:$0xff]
  %v1865 = vld [vmem:[%s1 + $0x550] sm:$0xff]
  %v1866 = vld [vmem:[%s1 + $0x560] sm:$0xff]
  %v1867 = vld [vmem:[%s1 + $0x570] sm:$0xff]
  %v1868 = vld [vmem:[%s1 + $0x580] sm:$0xff]
  %v1869 = vld [vmem:[%s1 + $0x590] sm:$0xff]
  %v1870 = vld [vmem:[%s1 + $0x5a0] sm:$0xff]
  %v1871 = vld [vmem:[%s1 + $0x5b0] sm:$0xff]
  %v1872 = vld [vmem:[%s1 + $0x5c0] ss:$0 sm:$0xff]
  %1873 = vmatprep.subr.mxu0 0.0
  %1874 = vmatpush1.msra.mxu0 %v1856
  %1875 = vmatprep.subr.mxu0 0.0
  %1876 = vmatpush1.msra.mxu0 %v1857
  %1877 = vmatprep.subr.mxu0 0.0
  %1878 = vmatpush1.msra.mxu0 %v1858
  %1879 = vmatprep.subr.mxu0 0.0
  %1880 = vmatpush1.msra.mxu0 %v1859
  %1881 = vmatprep.subr.mxu0 0.0
  %1882 = vmatpush1.msra.mxu0 %v1860
  %1883 = vmatprep.subr.mxu0 0.0
  %1884 = vmatpush1.msra.mxu0 %v1861
  %1885 = vmatprep.subr.mxu0 0.0
  %1886 = vmatpush1.msra.mxu0 %v1862
  %1887 = vmatprep.subr.mxu0 0.0
  %1888 = vmatpush1.msra.mxu0 %v1863
  %1889 = vmatprep.subr.mxu0 0.0
  %1890 = vmatpush1.msra.mxu0 %v1864
  %1891 = vmatprep.subr.mxu0 0.0
  %1892 = vmatpush1.msra.mxu0 %v1865
  %1893 = vmatprep.subr.mxu0 0.0
  %1894 = vmatpush1.msra.mxu0 %v1866
  %1895 = vmatprep.subr.mxu0 0.0
  %1896 = vmatpush1.msra.mxu0 %v1867
  %1897 = vmatprep.subr.mxu0 0.0
  %1898 = vmatpush1.msra.mxu0 %v1868
  %1899 = vmatprep.subr.mxu0 0.0
  %1900 = vmatpush1.msra.mxu0 %v1869
  %1901 = vmatprep.subr.mxu0 0.0
  %1902 = vmatpush1.msra.mxu0 %v1870
  %1903 = vmatprep.subr.mxu0 0.0
  %1904 = vmatpush1.msra.mxu0 %v1871
  %1905 = vmatprep.subr.mxu0 0.0
  %1906 = vmatpush1.msra.mxu0 0.0
  %1907 = vmatprep.subr.mxu0 0.0
  %1908 = vmatpush1.msra.mxu0 0.0
  %1909 = vmatprep.subr.mxu0 0.0
  %1910 = vmatpush1.msra.mxu0 0.0
  %1911 = vmatprep.subr.mxu0 0.0
  %1912 = vmatpush1.msra.mxu0 0.0
  %1913 = vmatprep.subr.mxu0 0.0
  %1914 = vmatpush1.msra.mxu0 0.0
  %1915 = vmatprep.subr.mxu0 0.0
  %1916 = vmatpush1.msra.mxu0 0.0
  %1917 = vmatprep.subr.mxu0 0.0
  %1918 = vmatpush1.msra.mxu0 0.0
  %1919 = vmatprep.subr.mxu0 0.0
  %1920 = vmatpush1.msra.mxu0 0.0
  %1921 = vmatprep.subr.mxu0 0.0
  %1922 = vmatpush1.msra.mxu0 0.0
  %1923 = vmatprep.subr.mxu0 0.0
  %1924 = vmatpush1.msra.mxu0 0.0
  %1925 = vmatprep.subr.mxu0 0.0
  %1926 = vmatpush1.msra.mxu0 0.0
  %1927 = vmatprep.subr.mxu0 0.0
  %1928 = vmatpush1.msra.mxu0 0.0
  %1929 = vmatprep.subr.mxu0 0.0
  %1930 = vmatpush1.msra.mxu0 0.0
  %1931 = vmatprep.subr.mxu0 0.0
  %1932 = vmatpush1.msra.mxu0 0.0
  %1933 = vmatprep.subr.mxu0 0.0
  %1934 = vmatpush1.msra.mxu0 0.0
  %1935 = vmatprep.subr.mxu0 0.0
  %1936 = vmatpush1.msra.mxu0 0.0
  %1937 = vmatprep.mubr.f32.mxu0 0.0
  %1938 = vmatmul.mubr.f32.gmra.mrb[0].mxu0 %v1839
  %v1939 = vpop.f32.mrb[0].mxu0
  %v1940 = vadd.f32 %v1872, %v1939
  %v1941 = vpop.f32.mrb[0].mxu0
  %1942 = vmatprep.mubr.f32.mxu0 0.0
  %1943 = vmatmul.mubr.f32.gmra.mrb[0].mxu0 %v1840
  %v1944 = vpop.f32.mrb[0].mxu0
  %v1945 = vadd.f32 %v1872, %v1944
  %v1946 = vpop.f32.mrb[0].mxu0
  %1947 = vmatprep.mubr.f32.mxu0 0.0
  %1948 = vmatmul.mubr.f32.gmra.mrb[0].mxu0 %v1841
  %v1949 = vpop.f32.mrb[0].mxu0
  %v1950 = vadd.f32 %v1872, %v1949
  %v1951 = vpop.f32.mrb[0].mxu0
  %1952 = vmatprep.mubr.f32.mxu0 0.0
  %1953 = vmatmul.mubr.f32.gmra.mrb[0].mxu0 %v1842
  %v1954 = vpop.f32.mrb[0].mxu0
  %v1955 = vadd.f32 %v1872, %v1954
  %v1956 = vpop.f32.mrb[0].mxu0
  %1957 = vmatprep.mubr.f32.mxu0 0.0
  %1958 = vmatmul.mubr.f32.gmra.mrb[0].mxu0 %v1843
  %v1959 = vpop.f32.mrb[0].mxu0
  %v1960 = vadd.f32 %v1872, %v1959
  %v1961 = vpop.f32.mrb[0].mxu0
  %1962 = vmatprep.mubr.f32.mxu0 0.0
  %1963 = vmatmul.mubr.f32.gmra.mrb[0].mxu0 %v1844
  %v1964 = vpop.f32.mrb[0].mxu0
  %v1965 = vadd.f32 %v1872, %v1964
  %v1966 = vpop.f32.mrb[0].mxu0
  %1967 = vmatprep.mubr.f32.mxu0 0.0
  %1968 = vmatmul.mubr.f32.gmra.mrb[0].mxu0 %v1845
  %v1969 = vpop.f32.mrb[0].mxu0
  %v1970 = vadd.f32 %v1872, %v1969
  %v1971 = vpop.f32.mrb[0].mxu0
  %1972 = vmatprep.mubr.f32.mxu0 0.0
  %1973 = vmatmul.mubr.f32.gmra.mrb[0].mxu0 %v1846
  %v1974 = vpop.f32.mrb[0].mxu0
  %v1975 = vadd.f32 %v1872, %v1974
  %v1976 = vpop.f32.mrb[0].mxu0
  %1977 = vmatprep.mubr.f32.mxu0 0.0
  %1978 = vmatmul.mubr.f32.gmra.mrb[0].mxu0 %v1847
  %v1979 = vpop.f32.mrb[0].mxu0
  %v1980 = vadd.f32 %v1872, %v1979
  %v1981 = vpop.f32.mrb[0].mxu0
  %1982 = vmatprep.mubr.f32.mxu0 0.0
  %1983 = vmatmul.mubr.f32.gmra.mrb[0].mxu0 %v1848
  %v1984 = vpop.f32.mrb[0].mxu0
  %v1985 = vadd.f32 %v1872, %v1984
  %v1986 = vpop.f32.mrb[0].mxu0
  %1987 = vmatprep.mubr.f32.mxu0 0.0
  %1988 = vmatmul.mubr.f32.gmra.mrb[0].mxu0 %v1849
  %v1989 = vpop.f32.mrb[0].mxu0
  %v1990 = vadd.f32 %v1872, %v1989
  %v1991 = vpop.f32.mrb[0].mxu0
  %1992 = vmatprep.mubr.f32.mxu0 0.0
  %1993 = vmatmul.mubr.f32.gmra.mrb[0].mxu0 %v1850
  %v1994 = vpop.f32.mrb[0].mxu0
  %v1995 = vadd.f32 %v1872, %v1994
  %v1996 = vpop.f32.mrb[0].mxu0
  %1997 = vmatprep.mubr.f32.mxu0 0.0
  %1998 = vmatmul.mubr.f32.gmra.mrb[0].mxu0 %v1851
  %v1999 = vpop.f32.mrb[0].mxu0
  %v2000 = vadd.f32 %v1872, %v1999
  %v2001 = vpop.f32.mrb[0].mxu0
  %2002 = vmatprep.mubr.f32.mxu0 0.0
  %2003 = vmatmul.mubr.f32.gmra.mrb[0].mxu0 %v1852
  %v2004 = vpop.f32.mrb[0].mxu0
  %v2005 = vadd.f32 %v1872, %v2004
  %v2006 = vpop.f32.mrb[0].mxu0
  %2007 = vmatprep.mubr.f32.mxu0 0.0
  %2008 = vmatmul.mubr.f32.gmra.mrb[0].mxu0 %v1853
  %v2009 = vpop.f32.mrb[0].mxu0
  %v2010 = vadd.f32 %v1872, %v2009
  %v2011 = vpop.f32.mrb[0].mxu0
  %2012 = vmatprep.mubr.f32.mxu0 0.0
  %2013 = vmatmul.mubr.f32.gmra.mrb[0].mxu0 %v1854
  %v2014 = vpop.f32.mrb[0].mxu0
  %v2015 = vadd.f32 %v1872, %v2014
  %v2016 = vpop.f32.mrb[0].mxu0
  %2017 = vmatprep.mubr.f32.mxu0 0.0
  %2018 = vmatmul.mubr.f32.gmra.mrb[0].mxu0 %v1855
  %v2019 = vpop.f32.mrb[0].mxu0
  %v2020 = vadd.f32 %v1872, %v2019
  %v2021 = vpop.f32.mrb[0].mxu0
  %2022 = vdwg.mxu0
  %vm2023 = vcmp.gt.f32.partialorder %v1940, 0.0
  %vm2024 = vcmp.gt.f32.partialorder %v1945, 0.0
  %vm2025 = vcmp.gt.f32.partialorder %v1950, 0.0
  %vm2026 = vcmp.gt.f32.partialorder %v1955, 0.0
  %vm2027 = vcmp.gt.f32.partialorder %v1960, 0.0
  %vm2028 = vcmp.gt.f32.partialorder %v1965, 0.0
  %vm2029 = vcmp.gt.f32.partialorder %v1970, 0.0
  %vm2030 = vcmp.gt.f32.partialorder %v1975, 0.0
  %vm2031 = vcmp.gt.f32.partialorder %v1980, 0.0
  %vm2032 = vcmp.gt.f32.partialorder %v1985, 0.0
  %vm2033 = vcmp.gt.f32.partialorder %v1990, 0.0
  %vm2034 = vcmp.gt.f32.partialorder %v1995, 0.0
  %vm2035 = vcmp.gt.f32.partialorder %v2000, 0.0
  %vm2036 = vcmp.gt.f32.partialorder %v2005, 0.0
  %vm2037 = vcmp.gt.f32.partialorder %v2010, 0.0
  %vm2038 = vcmp.gt.f32.partialorder %v2015, 0.0
  %vm2039 = vcmp.gt.f32.partialorder %v2020, 0.0
  %v2040 = vmul.f32 %v1940, 1.442695
  %v2041 = vpow.pop %v2040
  %v2042 = vmul.f32 %v1945, 1.442695
  %v2043 = vpow.pop %v2042
  %v2044 = vmul.f32 %v1950, 1.442695
  %v2045 = vpow.pop %v2044
  %v2046 = vmul.f32 %v1955, 1.442695
  %v2047 = vpow.pop %v2046
  %v2048 = vmul.f32 %v1960, 1.442695
  %v2049 = vpow.pop %v2048
  %v2050 = vmul.f32 %v1965, 1.442695
  %v2051 = vpow.pop %v2050
  %v2052 = vmul.f32 %v1970, 1.442695
  %v2053 = vpow.pop %v2052
  %v2054 = vmul.f32 %v1975, 1.442695
  %v2055 = vpow.pop %v2054
  %v2056 = vmul.f32 %v1980, 1.442695
  %v2057 = vpow.pop %v2056
  %v2058 = vmul.f32 %v1985, 1.442695
  %v2059 = vpow.pop %v2058
  %v2060 = vmul.f32 %v1990, 1.442695
  %v2061 = vpow.pop %v2060
  %v2062 = vmul.f32 %v1995, 1.442695
  %v2063 = vpow.pop %v2062
  %v2064 = vmul.f32 %v2000, 1.442695
  %v2065 = vpow.pop %v2064
  %v2066 = vmul.f32 %v2005, 1.442695
  %v2067 = vpow.pop %v2066
  %v2068 = vmul.f32 %v2010, 1.442695
  %v2069 = vpow.pop %v2068
  %v2070 = vmul.f32 %v2015, 1.442695
  %v2071 = vpow.pop %v2070
  %v2072 = vmul.f32 %v2020, 1.442695
  %v2073 = vpow.pop %v2072
  %v2074 = vsub.f32 %v2041, 1.0
  %v2075 = vsub.f32 %v2043, 1.0
  %v2076 = vsub.f32 %v2045, 1.0
  %v2077 = vsub.f32 %v2047, 1.0
  %v2078 = vsub.f32 %v2049, 1.0
  %v2079 = vsub.f32 %v2051, 1.0
  %v2080 = vsub.f32 %v2053, 1.0
  %v2081 = vsub.f32 %v2055, 1.0
  %v2082 = vsub.f32 %v2057, 1.0
  %v2083 = vsub.f32 %v2059, 1.0
  %v2084 = vsub.f32 %v2061, 1.0
  %v2085 = vsub.f32 %v2063, 1.0
  %v2086 = vsub.f32 %v2065, 1.0
  %v2087 = vsub.f32 %v2067, 1.0
  %v2088 = vsub.f32 %v2069, 1.0
  %v2089 = vsub.f32 %v2071, 1.0
  %v2090 = vsub.f32 %v2073, 1.0
  %v2091 = vsel %vm2023, %v1940, %v2074
  %v2092 = vsel %vm2024, %v1945, %v2075
  %v2093 = vsel %vm2025, %v1950, %v2076
  %v2094 = vsel %vm2026, %v1955, %v2077
  %v2095 = vsel %vm2027, %v1960, %v2078
  %v2096 = vsel %vm2028, %v1965, %v2079
  %v2097 = vsel %vm2029, %v1970, %v2080
  %v2098 = vsel %vm2030, %v1975, %v2081
  %v2099 = vsel %vm2031, %v1980, %v2082
  %v2100 = vsel %vm2032, %v1985, %v2083
  %v2101 = vsel %vm2033, %v1990, %v2084
  %v2102 = vsel %vm2034, %v1995, %v2085
  %v2103 = vsel %vm2035, %v2000, %v2086
  %v2104 = vsel %vm2036, %v2005, %v2087
  %v2105 = vsel %vm2037, %v2010, %v2088
  %v2106 = vsel %vm2038, %v2015, %v2089
  %v2107 = vsel %vm2039, %v2020, %v2090
  %v2108 = vadd.f32 %v2091, 1.0
  %v2109 = vadd.f32 %v2092, 1.0
  %v2110 = vadd.f32 %v2093, 1.0
  %v2111 = vadd.f32 %v2094, 1.0
  %v2112 = vadd.f32 %v2095, 1.0
  %v2113 = vadd.f32 %v2096, 1.0
  %v2114 = vadd.f32 %v2097, 1.0
  %v2115 = vadd.f32 %v2098, 1.0
  %v2116 = vadd.f32 %v2099, 1.0
  %v2117 = vadd.f32 %v2100, 1.0
  %v2118 = vadd.f32 %v2101, 1.0
  %v2119 = vadd.f32 %v2102, 1.0
  %v2120 = vadd.f32 %v2103, 1.0
  %v2121 = vadd.f32 %v2104, 1.0
  %v2122 = vadd.f32 %v2105, 1.0
  %v2123 = vadd.f32 %v2106, 1.0
  %v2124 = vadd.f32 %v2107, 1.0
  %v2125 = vmul.f32 %v2108, %v1049
  %v2126 = vmul.f32 %v2109, %v1054
  %v2127 = vmul.f32 %v2110, %v1059
  %v2128 = vmul.f32 %v2111, %v1064
  %v2129 = vmul.f32 %v2112, %v1069
  %v2130 = vmul.f32 %v2113, %v1074
  %v2131 = vmul.f32 %v2114, %v1079
  %v2132 = vmul.f32 %v2115, %v1084
  %v2133 = vmul.f32 %v2116, %v1089
  %v2134 = vmul.f32 %v2117, %v1094
  %v2135 = vmul.f32 %v2118, %v1099
  %v2136 = vmul.f32 %v2119, %v1104
  %v2137 = vmul.f32 %v2120, %v1109
  %v2138 = vmul.f32 %v2121, %v1114
  %v2139 = vmul.f32 %v2122, %v1119
  %v2140 = vmul.f32 %v2123, %v1124
  %v2141 = vmul.f32 %v2124, %v1129
  %v2142 = vsel %vm63, %v2125, 0.0
  %v2143 = vsel %vm63, %v2126, 0.0
  %v2144 = vadd.f32 %v2142, %v2143
  %v2145 = vsel %vm63, %v2127, 0.0
  %v2146 = vadd.f32 %v2144, %v2145
  %v2147 = vsel %vm63, %v2128, 0.0
  %v2148 = vadd.f32 %v2146, %v2147
  %v2149 = vsel %vm63, %v2129, 0.0
  %v2150 = vadd.f32 %v2148, %v2149
  %v2151 = vsel %vm63, %v2130, 0.0
  %v2152 = vadd.f32 %v2150, %v2151
  %v2153 = vsel %vm63, %v2131, 0.0
  %v2154 = vadd.f32 %v2152, %v2153
  %v2155 = vsel %vm63, %v2132, 0.0
  %v2156 = vadd.f32 %v2154, %v2155
  %v2157 = vsel %vm63, %v2133, 0.0
  %v2158 = vadd.f32 %v2156, %v2157
  %v2159 = vsel %vm63, %v2134, 0.0
  %v2160 = vadd.f32 %v2158, %v2159
  %v2161 = vsel %vm63, %v2135, 0.0
  %v2162 = vadd.f32 %v2160, %v2161
  %v2163 = vsel %vm63, %v2136, 0.0
  %v2164 = vadd.f32 %v2162, %v2163
  %v2165 = vsel %vm63, %v2137, 0.0
  %v2166 = vadd.f32 %v2164, %v2165
  %v2167 = vsel %vm63, %v2138, 0.0
  %v2168 = vadd.f32 %v2166, %v2167
  %v2169 = vsel %vm63, %v2139, 0.0
  %v2170 = vadd.f32 %v2168, %v2169
  %v2171 = vsel %vm63, %v2140, 0.0
  %v2172 = vadd.f32 %v2170, %v2171
  %v2173 = vsel %vm63, %v2141, 0.0
  %v2174 = vadd.f32 %v2172, %v2173
  %v2175 = vmul.f32 %v2174, %v1215
  %v2176 = vadd.f32 %v2175, %v1483
  %2177 = vst.msk [vmem:[%s2] sm:$0xff] %vm63, %v2176
  // Predicated region
  $region10: #{tpu_custom_call.1} parent=0 // pred_check
    _
  $region11: #{tpu_custom_call.1} parent=0 // pred_check_branch
    %2179 = sbr.rel (0) target = $region13
  $region12: #{tpu_custom_call.1} parent=0 // pred_region
    _
  $region13: #{tpu_custom_call.1} parent=0 // pred_fallthru
    _
  // Predicated region
  $region14: #{tpu_custom_call.1} parent=0 // pred_check
    _
  $region15: #{tpu_custom_call.1} parent=0 // pred_check_branch
    %2181 = sbr.rel (0) target = $region17
  $region16: #{tpu_custom_call.1} parent=0 // pred_region
    _
  $region17: #{tpu_custom_call.1} parent=0 // pred_fallthru
    _

</llo_original>
